<compile_context>
chip_gen: v6e
topology: v6e:2x2x1
jax: 0.10.0
libtpu: 0.0.40
codegen_flags: <defaults>
</compile_context>

<pallas_src>
import functools

import jax
import jax.numpy as jnp
from jax.experimental import pallas as pl
from jax.experimental.pallas import tpu as pltpu


SUBLANE = 8  # pad channel counts to a multiple of this -> tile-aligned tap slabs


def _round_up(x, m):
    return (x + m - 1) // m * m


def _fused_vgg_kernel(H, W, B,
                      x_ref, m_ref, p_ref,
                      w1_ref, b1_ref, w2_ref, b2_ref,
                      wh1_ref, bh1_ref, wh2_ref, bh2_ref,
                      o_ref):
    """One block of B images per grid step (images concatenated on the lane axis).

    x_ref   : [Cp, B*H*W]   channels on sublanes, (image, flattened spatial) on lanes
    m_ref   : [9, B*H*W]    per-tap halo masks (pad=1), tiled per image
    p_ref   : [B*H*W, B]    block-diagonal average-pool matrix (entries 1/(H*W))
    w1_ref  : [C1, 9*Cp]    conv1 weights flattened over (tap, in-channel); b1_ref [C1,1]
    w2_ref  : [C2, 9*C1]    conv2 weights;                                  b2_ref [C2,1]
    wh1_ref : [HID, C2]     head linear1 (PyTorch [out,in]);               bh1_ref [HID,1]
    wh2_ref : [OUT, HID]    head linear2;                                  bh2_ref [OUT,1]
    o_ref   : [1, OUT, B]
    """
    HW = H * W
    L = B * HW

    # Hoist the mask load: one [9, L] read per step, indexed as a value below.
    masks = m_ref[...]

    def conv3x3_relu(x2d, w_ref, b_ref):
        # In-register shifted-tap stack: 9 lane-rotated copies of x2d, each
        # masked at the image halo (padding=1 handled in-kernel). Circular
        # wrap / cross-image borrow only lands where the mask is 0.
        slabs = []
        for t in range(9):
            kh, kw = t // 3, t % 3
            d = (kh - 1) * W + (kw - 1)          # flattened spatial shift of tap t
            if d == 0:
                slabs.append(x2d)                # centre tap: no shift, no halo
            else:
                shifted = pltpu.roll(x2d, (-d) % L, axis=1)
                slabs.append(shifted * masks[t:t + 1, :])
        stack = jnp.concatenate(slabs, axis=0)   # [9*C, L], stays in vregs
        a = jnp.dot(w_ref[...], stack, preferred_element_type=jnp.float32)
        return jnp.maximum(a + b_ref[...], 0.0)

    x = x_ref[...].astype(jnp.float32)                       # [Cp, L]
    a1 = conv3x3_relu(x, w1_ref, b1_ref)                     # [C1, L]
    a2 = conv3x3_relu(a1, w2_ref, b2_ref)                    # [C2, L]

    # Global average pool as one matmul (MXU) -> per-image pooled vectors.
    pooled = jnp.dot(a2, p_ref[...], preferred_element_type=jnp.float32)   # [C2, B]

    # Head: Linear + ReLU, Linear — batched over the B images on the lane axis.
    h = jnp.dot(wh1_ref[...], pooled,
                preferred_element_type=jnp.float32) + bh1_ref[...]         # [HID, B]
    h = jnp.maximum(h, 0.0)
    y = jnp.dot(wh2_ref[...], h,
                preferred_element_type=jnp.float32) + bh2_ref[...]         # [OUT, B]

    o_ref[...] = y.reshape(o_ref.shape).astype(o_ref.dtype)


def vgg_conv_forward(x_nchw, params, *, block_batch=8):
    """Forward pass matching the PyTorch VGGConv module. x_nchw: [N, Cin, H, W].

    block_batch: images processed per grid step. For v7x pick it so the grid
    length (ceil(N/block_batch)) is a multiple of 2 to keep both TensorCores busy.
    """
    N, Cin, H, W = x_nchw.shape
    HW = H * W
    C1 = params["w_c1"].shape[0]
    C2 = params["w_c2"].shape[0]
    HID = params["w_h1"].shape[0]
    OUT = params["w_h2"].shape[0]
    dtype = x_nchw.dtype

    # Pad input channels to a sublane multiple (4 -> 8): matching weight
    # columns are zero so the result is unchanged.
    Cp = _round_up(Cin, SUBLANE)
    B = max(1, min(block_batch, N))
    N_pad = _round_up(N, B)
    G = N_pad // B
    L = B * HW

    # Keep PyTorch's NCHW order; flatten spatial, then concatenate images on
    # the lane axis (image-major): lanes [n*HW, (n+1)*HW) hold image n.
    x_flat = x_nchw.reshape(N, Cin, HW)
    x_flat = jnp.pad(x_flat, ((0, N_pad - N), (0, Cp - Cin), (0, 0)))
    x_lanes = jnp.transpose(x_flat, (1, 0, 2)).reshape(Cp, N_pad * HW)

    # Conv weights [Cout, Cin, 3, 3] -> [Cout, 9*Cin_pad], ordered (tap, in-channel)
    # to match the kernel's tap stack.
    def flatten_conv_w(w, cin_pad):
        cout, cin = w.shape[0], w.shape[1]
        wt = jnp.transpose(w, (0, 2, 3, 1))                  # [Cout, 3, 3, Cin]
        wt = jnp.pad(wt, ((0, 0), (0, 0), (0, 0), (0, cin_pad - cin)))
        return wt.reshape(cout, 9 * cin_pad)

    w1 = flatten_conv_w(params["w_c1"], Cp)                  # [C1, 9*Cp]
    w2 = flatten_conv_w(params["w_c2"], C1)                  # [C2, 9*C1]
    b1 = params["b_c1"].reshape(C1, 1)
    b2 = params["b_c2"].reshape(C2, 1)
    wh1 = params["w_h1"]                                     # [HID, C2]
    bh1 = params["b_h1"].reshape(HID, 1)
    wh2 = params["w_h2"]                                     # [OUT, HID]
    bh2 = params["b_h2"].reshape(OUT, 1)

    # Per-tap halo masks for padding=1, tiled across the B images of a block.
    pos = jnp.arange(HW, dtype=jnp.int32)
    row, col = pos // W, pos % W
    masks = []
    for kh in range(3):
        for kw in range(3):
            dh, dw = kh - 1, kw - 1
            valid = ((row + dh >= 0) & (row + dh < H)
                     & (col + dw >= 0) & (col + dw < W))
            masks.append(valid.astype(jnp.float32))
    tap_masks = jnp.tile(jnp.stack(masks, axis=0), (1, B))   # [9, B*HW]

    # Block-diagonal average-pool matrix: P[n*HW + q, n] = 1/HW.
    img_id = jnp.repeat(jnp.arange(B, dtype=jnp.int32), HW)
    pool_mat = (img_id[:, None] == jnp.arange(B, dtype=jnp.int32)[None, :]
                ).astype(jnp.float32) / float(HW)            # [B*HW, B]

    kernel = functools.partial(_fused_vgg_kernel, H, W, B)

    out = pl.pallas_call(
        kernel,
        out_shape=jax.ShapeDtypeStruct((G, OUT, B), dtype),
        grid_spec=pltpu.PrefetchScalarGridSpec(
            num_scalar_prefetch=0,
            grid=(G,),
            in_specs=[
                pl.BlockSpec((Cp, L), lambda g: (0, g)),        # x (B images per block)
                pl.BlockSpec((9, L), lambda g: (0, 0)),         # halo masks
                pl.BlockSpec((L, B), lambda g: (0, 0)),         # pooling matrix
                pl.BlockSpec((C1, 9 * Cp), lambda g: (0, 0)),   # conv1 weight
                pl.BlockSpec((C1, 1), lambda g: (0, 0)),        # conv1 bias
                pl.BlockSpec((C2, 9 * C1), lambda g: (0, 0)),   # conv2 weight
                pl.BlockSpec((C2, 1), lambda g: (0, 0)),        # conv2 bias
                pl.BlockSpec((HID, C2), lambda g: (0, 0)),      # head linear1 weight
                pl.BlockSpec((HID, 1), lambda g: (0, 0)),       # head linear1 bias
                pl.BlockSpec((OUT, HID), lambda g: (0, 0)),     # head linear2 weight
                pl.BlockSpec((OUT, 1), lambda g: (0, 0)),       # head linear2 bias
            ],
            out_specs=pl.BlockSpec((1, OUT, B), lambda g: (g, 0, 0)),
        ),
        compiler_params=pltpu.CompilerParams(
            dimension_semantics=("parallel",)),
    )(x_lanes, tap_masks, pool_mat, w1, b1, w2, b2, wh1, bh1, wh2, bh2)

    # [G, OUT, B] -> [N, OUT] (drop any batch padding).
    return jnp.transpose(out, (0, 2, 1)).reshape(N_pad, OUT)[:N]


def ref_forward(x_nchw, params):
    """Plain-JAX (XLA) reference for numerical verification."""
    y = x_nchw
    for w, b in ((params["w_c1"], params["b_c1"]),
                 (params["w_c2"], params["b_c2"])):
        y = jax.lax.conv_general_dilated(
            y, w, window_strides=(1, 1), padding=((1, 1), (1, 1)),
            dimension_numbers=("NCHW", "OIHW", "NCHW"))
        y = jax.nn.relu(y + b[None, :, None, None])
    p = jnp.mean(y, axis=(2, 3))                             # [N, C2]
    h = jax.nn.relu(p @ params["w_h1"].T + params["b_h1"])
    return h @ params["w_h2"].T + params["b_h2"]


if __name__ == "__main__":
    N, Cin, H, W = 2, 4, 16, 16
    C1, C2, HID, OUT = 8, 16, 32, 1

    key = jax.random.PRNGKey(0)
    ks = jax.random.split(key, 9)
    scale = 0.1
    params = {  # PyTorch layouts: conv [Cout, Cin, kh, kw], linear [out, in]
        "w_c1": scale * jax.random.normal(ks[0], (C1, Cin, 3, 3), jnp.float32),
        "b_c1": scale * jax.random.normal(ks[1], (C1,), jnp.float32),
        "w_c2": scale * jax.random.normal(ks[2], (C2, C1, 3, 3), jnp.float32),
        "b_c2": scale * jax.random.normal(ks[3], (C2,), jnp.float32),
        "w_h1": scale * jax.random.normal(ks[4], (HID, C2), jnp.float32),
        "b_h1": scale * jax.random.normal(ks[5], (HID,), jnp.float32),
        "w_h2": scale * jax.random.normal(ks[6], (OUT, HID), jnp.float32),
        "b_h2": scale * jax.random.normal(ks[7], (OUT,), jnp.float32),
    }
    x = jax.random.normal(ks[8], (N, Cin, H, W), jnp.float32)   # NCHW, like PyTorch

    out = jax.block_until_ready(vgg_conv_forward(x, params))
    ref = jax.block_until_ready(ref_forward(x, params))

    assert out.shape == (N, OUT), out.shape
    assert jnp.allclose(out, ref, atol=1e-4, rtol=1e-4), (out, ref)
    print("KERNEL_OK")
</pallas_src>

<mosaic_0001>
module attributes {stable_mosaic.version = 11 : i64} {
  func.func @_fused_vgg_kernel(%arg0: i32, %arg1: memref<8x512xf32, #tpu.memory_space<vmem>>, %arg2: memref<9x512xf32, #tpu.memory_space<vmem>>, %arg3: memref<512x2xf32, #tpu.memory_space<vmem>>, %arg4: memref<8x72xf32, #tpu.memory_space<vmem>>, %arg5: memref<8x1xf32, #tpu.memory_space<vmem>>, %arg6: memref<16x72xf32, #tpu.memory_space<vmem>>, %arg7: memref<16x1xf32, #tpu.memory_space<vmem>>, %arg8: memref<32x16xf32, #tpu.memory_space<vmem>>, %arg9: memref<32x1xf32, #tpu.memory_space<vmem>>, %arg10: memref<1x32xf32, #tpu.memory_space<vmem>>, %arg11: memref<1x1xf32, #tpu.memory_space<vmem>>, %arg12: memref<1x1x2xf32, #tpu.memory_space<vmem>>) attributes {dimension_semantics = [#tpu.dimension_semantics<parallel>], iteration_bounds = array<i64: 1>, scalar_prefetch = 0 : i64, scratch_operands = 0 : i64, tpu.core_type = #tpu.core_type<tc>, window_params = [{transform_indices = @transform_0, window_bounds = array<i64: 8, 512>}, {pipeline_mode = #tpu.pipeline_mode<synchronous>, transform_indices = @transform_1, window_bounds = array<i64: 9, 512>}, {pipeline_mode = #tpu.pipeline_mode<synchronous>, transform_indices = @transform_2, window_bounds = array<i64: 512, 2>}, {pipeline_mode = #tpu.pipeline_mode<synchronous>, transform_indices = @transform_3, window_bounds = array<i64: 8, 72>}, {pipeline_mode = #tpu.pipeline_mode<synchronous>, transform_indices = @transform_4, window_bounds = array<i64: 8, 1>}, {pipeline_mode = #tpu.pipeline_mode<synchronous>, transform_indices = @transform_5, window_bounds = array<i64: 16, 72>}, {pipeline_mode = #tpu.pipeline_mode<synchronous>, transform_indices = @transform_6, window_bounds = array<i64: 16, 1>}, {pipeline_mode = #tpu.pipeline_mode<synchronous>, transform_indices = @transform_7, window_bounds = array<i64: 32, 16>}, {pipeline_mode = #tpu.pipeline_mode<synchronous>, transform_indices = @transform_8, window_bounds = array<i64: 32, 1>}, {pipeline_mode = #tpu.pipeline_mode<synchronous>, transform_indices = @transform_9, window_bounds = array<i64: 1, 32>}, {pipeline_mode = #tpu.pipeline_mode<synchronous>, transform_indices = @transform_10, window_bounds = array<i64: 1, 1>}, {transform_indices = @transform_11, window_bounds = array<i64: 1, 1, 2>}]} {
    %c0 = arith.constant 0 : index
    %c0_0 = arith.constant 0 : index
    %0 = vector.load %arg2[%c0, %c0_0] : memref<9x512xf32, #tpu.memory_space<vmem>>, vector<9x512xf32>
    %c0_1 = arith.constant 0 : index
    %c0_2 = arith.constant 0 : index
    %1 = vector.load %arg1[%c0_1, %c0_2] : memref<8x512xf32, #tpu.memory_space<vmem>>, vector<8x512xf32>
    %c17_i32 = arith.constant 17 : i32
    %2 = tpu.dynamic_rotate %1 by %c17_i32 dim 1 : vector<8x512xf32>, i32 -> vector<8x512xf32>
    %3 = vector.extract_strided_slice %0 {offsets = [0, 0], sizes = [1, 512], strides = [1, 1]} : vector<9x512xf32> to vector<1x512xf32>
    %4 = vector.broadcast %3 : vector<1x512xf32> to vector<8x512xf32>
    %5 = arith.mulf %2, %4 : vector<8x512xf32>
    %c16_i32 = arith.constant 16 : i32
    %6 = tpu.dynamic_rotate %1 by %c16_i32 dim 1 : vector<8x512xf32>, i32 -> vector<8x512xf32>
    %7 = vector.extract_strided_slice %0 {offsets = [1, 0], sizes = [1, 512], strides = [1, 1]} : vector<9x512xf32> to vector<1x512xf32>
    %8 = vector.broadcast %7 : vector<1x512xf32> to vector<8x512xf32>
    %9 = arith.mulf %6, %8 : vector<8x512xf32>
    %c15_i32 = arith.constant 15 : i32
    %10 = tpu.dynamic_rotate %1 by %c15_i32 dim 1 : vector<8x512xf32>, i32 -> vector<8x512xf32>
    %11 = vector.extract_strided_slice %0 {offsets = [2, 0], sizes = [1, 512], strides = [1, 1]} : vector<9x512xf32> to vector<1x512xf32>
    %12 = vector.broadcast %11 : vector<1x512xf32> to vector<8x512xf32>
    %13 = arith.mulf %10, %12 : vector<8x512xf32>
    %c1_i32 = arith.constant 1 : i32
    %14 = tpu.dynamic_rotate %1 by %c1_i32 dim 1 : vector<8x512xf32>, i32 -> vector<8x512xf32>
    %15 = vector.extract_strided_slice %0 {offsets = [3, 0], sizes = [1, 512], strides = [1, 1]} : vector<9x512xf32> to vector<1x512xf32>
    %16 = vector.broadcast %15 : vector<1x512xf32> to vector<8x512xf32>
    %17 = arith.mulf %14, %16 : vector<8x512xf32>
    %c511_i32 = arith.constant 511 : i32
    %18 = tpu.dynamic_rotate %1 by %c511_i32 dim 1 : vector<8x512xf32>, i32 -> vector<8x512xf32>
    %19 = vector.extract_strided_slice %0 {offsets = [5, 0], sizes = [1, 512], strides = [1, 1]} : vector<9x512xf32> to vector<1x512xf32>
    %20 = vector.broadcast %19 : vector<1x512xf32> to vector<8x512xf32>
    %21 = arith.mulf %18, %20 : vector<8x512xf32>
    %c497_i32 = arith.constant 497 : i32
    %22 = tpu.dynamic_rotate %1 by %c497_i32 dim 1 : vector<8x512xf32>, i32 -> vector<8x512xf32>
    %23 = vector.extract_strided_slice %0 {offsets = [6, 0], sizes = [1, 512], strides = [1, 1]} : vector<9x512xf32> to vector<1x512xf32>
    %24 = vector.broadcast %23 : vector<1x512xf32> to vector<8x512xf32>
    %25 = arith.mulf %22, %24 : vector<8x512xf32>
    %c496_i32 = arith.constant 496 : i32
    %26 = tpu.dynamic_rotate %1 by %c496_i32 dim 1 : vector<8x512xf32>, i32 -> vector<8x512xf32>
    %27 = vector.extract_strided_slice %0 {offsets = [7, 0], sizes = [1, 512], strides = [1, 1]} : vector<9x512xf32> to vector<1x512xf32>
    %28 = vector.broadcast %27 : vector<1x512xf32> to vector<8x512xf32>
    %29 = arith.mulf %26, %28 : vector<8x512xf32>
    %c495_i32 = arith.constant 495 : i32
    %30 = tpu.dynamic_rotate %1 by %c495_i32 dim 1 : vector<8x512xf32>, i32 -> vector<8x512xf32>
    %31 = vector.extract_strided_slice %0 {offsets = [8, 0], sizes = [1, 512], strides = [1, 1]} : vector<9x512xf32> to vector<1x512xf32>
    %32 = vector.broadcast %31 : vector<1x512xf32> to vector<8x512xf32>
    %33 = arith.mulf %30, %32 : vector<8x512xf32>
    %34 = tpu.concatenate %5, %9, %13, %17, %1, %21, %25, %29, %33 in 0 : vector<8x512xf32>, vector<8x512xf32>, vector<8x512xf32>, vector<8x512xf32>, vector<8x512xf32>, vector<8x512xf32>, vector<8x512xf32>, vector<8x512xf32>, vector<8x512xf32> -> vector<72x512xf32>
    %c0_3 = arith.constant 0 : index
    %c0_4 = arith.constant 0 : index
    %35 = vector.load %arg4[%c0_3, %c0_4] : memref<8x72xf32, #tpu.memory_space<vmem>>, vector<8x72xf32>
    %cst = arith.constant dense<0.000000e+00> : vector<8x512xf32>
    %36 = tpu.matmul %35, %34, %cst {dimension_numbers = #tpu.dot_dimension_numbers<[1], [0], [0], [1], [0, 0, 1, 1], [], []>} : vector<8x72xf32>, vector<72x512xf32>, vector<8x512xf32> -> vector<8x512xf32>
    %c0_5 = arith.constant 0 : index
    %c0_6 = arith.constant 0 : index
    %37 = vector.load %arg5[%c0_5, %c0_6] : memref<8x1xf32, #tpu.memory_space<vmem>>, vector<8x1xf32>
    %38 = vector.broadcast %37 : vector<8x1xf32> to vector<8x512xf32>
    %39 = arith.addf %36, %38 : vector<8x512xf32>
    %cst_7 = arith.constant 0.000000e+00 : f32
    %40 = vector.broadcast %cst_7 : f32 to vector<8x512xf32>
    %41 = arith.maximumf %39, %40 : vector<8x512xf32>
    %c17_i32_8 = arith.constant 17 : i32
    %42 = tpu.dynamic_rotate %41 by %c17_i32_8 dim 1 : vector<8x512xf32>, i32 -> vector<8x512xf32>
    %43 = vector.extract_strided_slice %0 {offsets = [0, 0], sizes = [1, 512], strides = [1, 1]} : vector<9x512xf32> to vector<1x512xf32>
    %44 = vector.broadcast %43 : vector<1x512xf32> to vector<8x512xf32>
    %45 = arith.mulf %42, %44 : vector<8x512xf32>
    %c16_i32_9 = arith.constant 16 : i32
    %46 = tpu.dynamic_rotate %41 by %c16_i32_9 dim 1 : vector<8x512xf32>, i32 -> vector<8x512xf32>
    %47 = vector.extract_strided_slice %0 {offsets = [1, 0], sizes = [1, 512], strides = [1, 1]} : vector<9x512xf32> to vector<1x512xf32>
    %48 = vector.broadcast %47 : vector<1x512xf32> to vector<8x512xf32>
    %49 = arith.mulf %46, %48 : vector<8x512xf32>
    %c15_i32_10 = arith.constant 15 : i32
    %50 = tpu.dynamic_rotate %41 by %c15_i32_10 dim 1 : vector<8x512xf32>, i32 -> vector<8x512xf32>
    %51 = vector.extract_strided_slice %0 {offsets = [2, 0], sizes = [1, 512], strides = [1, 1]} : vector<9x512xf32> to vector<1x512xf32>
    %52 = vector.broadcast %51 : vector<1x512xf32> to vector<8x512xf32>
    %53 = arith.mulf %50, %52 : vector<8x512xf32>
    %c1_i32_11 = arith.constant 1 : i32
    %54 = tpu.dynamic_rotate %41 by %c1_i32_11 dim 1 : vector<8x512xf32>, i32 -> vector<8x512xf32>
    %55 = vector.extract_strided_slice %0 {offsets = [3, 0], sizes = [1, 512], strides = [1, 1]} : vector<9x512xf32> to vector<1x512xf32>
    %56 = vector.broadcast %55 : vector<1x512xf32> to vector<8x512xf32>
    %57 = arith.mulf %54, %56 : vector<8x512xf32>
    %c511_i32_12 = arith.constant 511 : i32
    %58 = tpu.dynamic_rotate %41 by %c511_i32_12 dim 1 : vector<8x512xf32>, i32 -> vector<8x512xf32>
    %59 = vector.extract_strided_slice %0 {offsets = [5, 0], sizes = [1, 512], strides = [1, 1]} : vector<9x512xf32> to vector<1x512xf32>
    %60 = vector.broadcast %59 : vector<1x512xf32> to vector<8x512xf32>
    %61 = arith.mulf %58, %60 : vector<8x512xf32>
    %c497_i32_13 = arith.constant 497 : i32
    %62 = tpu.dynamic_rotate %41 by %c497_i32_13 dim 1 : vector<8x512xf32>, i32 -> vector<8x512xf32>
    %63 = vector.extract_strided_slice %0 {offsets = [6, 0], sizes = [1, 512], strides = [1, 1]} : vector<9x512xf32> to vector<1x512xf32>
    %64 = vector.broadcast %63 : vector<1x512xf32> to vector<8x512xf32>
    %65 = arith.mulf %62, %64 : vector<8x512xf32>
    %c496_i32_14 = arith.constant 496 : i32
    %66 = tpu.dynamic_rotate %41 by %c496_i32_14 dim 1 : vector<8x512xf32>, i32 -> vector<8x512xf32>
    %67 = vector.extract_strided_slice %0 {offsets = [7, 0], sizes = [1, 512], strides = [1, 1]} : vector<9x512xf32> to vector<1x512xf32>
    %68 = vector.broadcast %67 : vector<1x512xf32> to vector<8x512xf32>
    %69 = arith.mulf %66, %68 : vector<8x512xf32>
    %c495_i32_15 = arith.constant 495 : i32
    %70 = tpu.dynamic_rotate %41 by %c495_i32_15 dim 1 : vector<8x512xf32>, i32 -> vector<8x512xf32>
    %71 = vector.extract_strided_slice %0 {offsets = [8, 0], sizes = [1, 512], strides = [1, 1]} : vector<9x512xf32> to vector<1x512xf32>
    %72 = vector.broadcast %71 : vector<1x512xf32> to vector<8x512xf32>
    %73 = arith.mulf %70, %72 : vector<8x512xf32>
    %74 = tpu.concatenate %45, %49, %53, %57, %41, %61, %65, %69, %73 in 0 : vector<8x512xf32>, vector<8x512xf32>, vector<8x512xf32>, vector<8x512xf32>, vector<8x512xf32>, vector<8x512xf32>, vector<8x512xf32>, vector<8x512xf32>, vector<8x512xf32> -> vector<72x512xf32>
    %c0_16 = arith.constant 0 : index
    %c0_17 = arith.constant 0 : index
    %75 = vector.load %arg6[%c0_16, %c0_17] : memref<16x72xf32, #tpu.memory_space<vmem>>, vector<16x72xf32>
    %cst_18 = arith.constant dense<0.000000e+00> : vector<16x512xf32>
    %76 = tpu.matmul %75, %74, %cst_18 {dimension_numbers = #tpu.dot_dimension_numbers<[1], [0], [0], [1], [0, 0, 1, 1], [], []>} : vector<16x72xf32>, vector<72x512xf32>, vector<16x512xf32> -> vector<16x512xf32>
    %c0_19 = arith.constant 0 : index
    %c0_20 = arith.constant 0 : index
    %77 = vector.load %arg7[%c0_19, %c0_20] : memref<16x1xf32, #tpu.memory_space<vmem>>, vector<16x1xf32>
    %78 = vector.broadcast %77 : vector<16x1xf32> to vector<16x512xf32>
    %79 = arith.addf %76, %78 : vector<16x512xf32>
    %cst_21 = arith.constant 0.000000e+00 : f32
    %80 = vector.broadcast %cst_21 : f32 to vector<16x512xf32>
    %81 = arith.maximumf %79, %80 : vector<16x512xf32>
    %c0_22 = arith.constant 0 : index
    %c0_23 = arith.constant 0 : index
    %82 = vector.load %arg3[%c0_22, %c0_23] : memref<512x2xf32, #tpu.memory_space<vmem>>, vector<512x2xf32>
    %cst_24 = arith.constant dense<0.000000e+00> : vector<16x2xf32>
    %83 = tpu.matmul %81, %82, %cst_24 {dimension_numbers = #tpu.dot_dimension_numbers<[1], [0], [0], [1], [0, 0, 1, 1], [], []>} : vector<16x512xf32>, vector<512x2xf32>, vector<16x2xf32> -> vector<16x2xf32>
    %c0_25 = arith.constant 0 : index
    %c0_26 = arith.constant 0 : index
    %84 = vector.load %arg8[%c0_25, %c0_26] : memref<32x16xf32, #tpu.memory_space<vmem>>, vector<32x16xf32>
    %cst_27 = arith.constant dense<0.000000e+00> : vector<32x2xf32>
    %85 = tpu.matmul %84, %83, %cst_27 {dimension_numbers = #tpu.dot_dimension_numbers<[1], [0], [0], [1], [0, 0, 1, 1], [], []>} : vector<32x16xf32>, vector<16x2xf32>, vector<32x2xf32> -> vector<32x2xf32>
    %c0_28 = arith.constant 0 : index
    %c0_29 = arith.constant 0 : index
    %86 = vector.load %arg9[%c0_28, %c0_29] : memref<32x1xf32, #tpu.memory_space<vmem>>, vector<32x1xf32>
    %87 = vector.broadcast %86 : vector<32x1xf32> to vector<32x2xf32>
    %88 = arith.addf %85, %87 : vector<32x2xf32>
    %cst_30 = arith.constant 0.000000e+00 : f32
    %89 = vector.broadcast %cst_30 : f32 to vector<32x2xf32>
    %90 = arith.maximumf %88, %89 : vector<32x2xf32>
    %c0_31 = arith.constant 0 : index
    %c0_32 = arith.constant 0 : index
    %91 = vector.load %arg10[%c0_31, %c0_32] : memref<1x32xf32, #tpu.memory_space<vmem>>, vector<1x32xf32>
    %cst_33 = arith.constant dense<0.000000e+00> : vector<1x2xf32>
    %92 = tpu.matmul %91, %90, %cst_33 {dimension_numbers = #tpu.dot_dimension_numbers<[1], [0], [0], [1], [0, 0, 1, 1], [], []>} : vector<1x32xf32>, vector<32x2xf32>, vector<1x2xf32> -> vector<1x2xf32>
    %c0_34 = arith.constant 0 : index
    %c0_35 = arith.constant 0 : index
    %93 = vector.load %arg11[%c0_34, %c0_35] : memref<1x1xf32, #tpu.memory_space<vmem>>, vector<1x1xf32>
    %94 = vector.broadcast %93 : vector<1x1xf32> to vector<1x2xf32>
    %95 = arith.addf %92, %94 : vector<1x2xf32>
    %96 = vector.shape_cast %95 : vector<1x2xf32> to vector<1x1x2xf32>
    %c0_36 = arith.constant 0 : index
    %c0_37 = arith.constant 0 : index
    %c0_38 = arith.constant 0 : index
    %97 = vector.load %arg12[%c0_36, %c0_37, %c0_38] : memref<1x1x2xf32, #tpu.memory_space<vmem>>, vector<1x1x2xf32>
    tpu.vector_store %arg12[%c0_36, %c0_37, %c0_38], %96 {strides = array<i32>} : memref<1x1x2xf32, #tpu.memory_space<vmem>>, vector<1x1x2xf32>,
    return
  }
  func.func @transform_0(%arg0: i32) -> (i32, i32) {
    %c0_i32 = arith.constant 0 : i32
    %c0_i32_0 = arith.constant 0 : i32
    return %c0_i32, %arg0 : i32, i32
  }
  func.func @transform_1(%arg0: i32) -> (i32, i32) {
    %c0_i32 = arith.constant 0 : i32
    %c0_i32_0 = arith.constant 0 : i32
    %c0_i32_1 = arith.constant 0 : i32
    return %c0_i32, %c0_i32_0 : i32, i32
  }
  func.func @transform_2(%arg0: i32) -> (i32, i32) {
    %c0_i32 = arith.constant 0 : i32
    %c0_i32_0 = arith.constant 0 : i32
    %c0_i32_1 = arith.constant 0 : i32
    return %c0_i32, %c0_i32_0 : i32, i32
  }
  func.func @transform_3(%arg0: i32) -> (i32, i32) {
    %c0_i32 = arith.constant 0 : i32
    %c0_i32_0 = arith.constant 0 : i32
    %c0_i32_1 = arith.constant 0 : i32
    return %c0_i32, %c0_i32_0 : i32, i32
  }
  func.func @transform_4(%arg0: i32) -> (i32, i32) {
    %c0_i32 = arith.constant 0 : i32
    %c0_i32_0 = arith.constant 0 : i32
    %c0_i32_1 = arith.constant 0 : i32
    return %c0_i32, %c0_i32_0 : i32, i32
  }
  func.func @transform_5(%arg0: i32) -> (i32, i32) {
    %c0_i32 = arith.constant 0 : i32
    %c0_i32_0 = arith.constant 0 : i32
    %c0_i32_1 = arith.constant 0 : i32
    return %c0_i32, %c0_i32_0 : i32, i32
  }
  func.func @transform_6(%arg0: i32) -> (i32, i32) {
    %c0_i32 = arith.constant 0 : i32
    %c0_i32_0 = arith.constant 0 : i32
    %c0_i32_1 = arith.constant 0 : i32
    return %c0_i32, %c0_i32_0 : i32, i32
  }
  func.func @transform_7(%arg0: i32) -> (i32, i32) {
    %c0_i32 = arith.constant 0 : i32
    %c0_i32_0 = arith.constant 0 : i32
    %c0_i32_1 = arith.constant 0 : i32
    return %c0_i32, %c0_i32_0 : i32, i32
  }
  func.func @transform_8(%arg0: i32) -> (i32, i32) {
    %c0_i32 = arith.constant 0 : i32
    %c0_i32_0 = arith.constant 0 : i32
    %c0_i32_1 = arith.constant 0 : i32
    return %c0_i32, %c0_i32_0 : i32, i32
  }
  func.func @transform_9(%arg0: i32) -> (i32, i32) {
    %c0_i32 = arith.constant 0 : i32
    %c0_i32_0 = arith.constant 0 : i32
    %c0_i32_1 = arith.constant 0 : i32
    return %c0_i32, %c0_i32_0 : i32, i32
  }
  func.func @transform_10(%arg0: i32) -> (i32, i32) {
    %c0_i32 = arith.constant 0 : i32
    %c0_i32_0 = arith.constant 0 : i32
    %c0_i32_1 = arith.constant 0 : i32
    return %c0_i32, %c0_i32_0 : i32, i32
  }
  func.func @transform_11(%arg0: i32) -> (i32, i32, i32) {
    %c0_i32 = arith.constant 0 : i32
    %c0_i32_0 = arith.constant 0 : i32
    %c0_i32_1 = arith.constant 0 : i32
    return %arg0, %c0_i32, %c0_i32_0 : i32, i32, i32
  }
}

</mosaic_0001>

<llo_original>
// kernel: tpu_custom_call.1
$region0: #{tpu_custom_call.1}
  #allocation0 [shape = 'u32[]', space=smem, size = 0x4, offset = 0x4, fixed_abs, tag = 'smem constant byte address 0x4 - core index']
  #allocation1 [shape = 'u32[144,128]{1,0:T(1,128)}', space=vmem, size = 0x12000, scoped, tag = 'internal scratch']
  #allocation2 [shape = 'f32[1,1]{1,0:T(1,128)S(1)}', space=vmem, size = 0x200, scoped, tag = 'scoped memory for tpu_custom_call.1']
  %s0 = inlined_call_operand.vmem [shape: f32[8,512], index: 0, kind: input, shape index: {}]
  %s1 = inlined_call_operand.vmem [shape: f32[9,512], index: 1, kind: input, shape index: {}]
  %s2 = inlined_call_operand.vmem [shape: f32[512,2], index: 2, kind: input, shape index: {}]
  %s3 = inlined_call_operand.vmem [shape: f32[8,72], index: 3, kind: input, shape index: {}]
  %s4 = inlined_call_operand.vmem [shape: f32[8,1], index: 4, kind: input, shape index: {}]
  %s5 = inlined_call_operand.vmem [shape: f32[16,72], index: 5, kind: input, shape index: {}]
  %s6 = inlined_call_operand.vmem [shape: f32[16,1], index: 6, kind: input, shape index: {}]
  %s7 = inlined_call_operand.vmem [shape: f32[32,16], index: 7, kind: input, shape index: {}]
  %s8 = inlined_call_operand.vmem [shape: f32[32,1], index: 8, kind: input, shape index: {}]
  %s9 = inlined_call_operand.vmem [shape: f32[1,32], index: 9, kind: input, shape index: {}]
  %s10 = inlined_call_operand.<no memory space> [shape: f32[1,1], index: 10, kind: input, shape index: {}]
  %s11 = inlined_call_operand.hbm [shape: f32[1,1,2], index: 11, kind: output, shape index: {}]
  %s12 = sld [smem:[#allocation0]]
  $region54: #{tpu_custom_call.1} parent=0
    _
  %s14 = ssub.s32 1, %s12
  %s15 = scalar_select 0, %s14, %s12
  %v16 = vstv %s10
  %17 = vst [vmem:[#allocation2] sm:$0x1] %v16
  $region1: #{tpu_custom_call.1} parent=0
    #allocation3 [shape = 'u8[512]{0}', space=vmem, size = 0x400, scoped, tag = 'output window, operand 0, single buffered']
    #allocation4 [shape = 's32[1]{0}', space=sflag, size = 0x4, scoped, tag = 'scoped memory for tpu_custom_call.1']
    %18 = vsyncpa [#allocation4], 0
    // Predicated region
    $region2: #{tpu_custom_call.1} parent=1 // pred_check
      _
    $region3: #{tpu_custom_call.1} parent=1 // pred_check_branch
      %20 = sbr.rel (0) target = $region5
    $region4: #{tpu_custom_call.1} parent=1 // pred_region
      _
    $region5: #{tpu_custom_call.1} parent=1 // pred_fallthru
      _
    // Predicated region
    $region6: #{tpu_custom_call.1} parent=1 // pred_check
      _
    $region7: #{tpu_custom_call.1} parent=1 // pred_check_branch
      %22 = sbr.rel (0) target = $region9
    $region8: #{tpu_custom_call.1} parent=1 // pred_region
      _
    $region9: #{tpu_custom_call.1} parent=1 // pred_fallthru
      _
    // Predicated region
    $region10: #{tpu_custom_call.1} parent=1 // pred_check
      _
    $region11: #{tpu_custom_call.1} parent=1 // pred_check_branch
      %24 = sbr.rel (0) target = $region13
    $region12: #{tpu_custom_call.1} parent=1 // pred_region
      _
    $region13: #{tpu_custom_call.1} parent=1 // pred_fallthru
      _
    // Predicated region
    $region14: #{tpu_custom_call.1} parent=1 // pred_check
      _
    $region15: #{tpu_custom_call.1} parent=1 // pred_check_branch
      %26 = sbr.rel (0) target = $region17
    $region16: #{tpu_custom_call.1} parent=1 // pred_region
      _
    $region17: #{tpu_custom_call.1} parent=1 // pred_fallthru
      _
    // Predicated region
    $region18: #{tpu_custom_call.1} parent=1 // pred_check
      _
    $region19: #{tpu_custom_call.1} parent=1 // pred_check_branch
      %28 = sbr.rel (0) target = $region21
    $region20: #{tpu_custom_call.1} parent=1 // pred_region
      _
    $region21: #{tpu_custom_call.1} parent=1 // pred_fallthru
      _
    // Predicated region
    $region22: #{tpu_custom_call.1} parent=1 // pred_check
      _
    $region23: #{tpu_custom_call.1} parent=1 // pred_check_branch
      %30 = sbr.rel (0) target = $region25
    $region24: #{tpu_custom_call.1} parent=1 // pred_region
      _
    $region25: #{tpu_custom_call.1} parent=1 // pred_fallthru
      _
    // Predicated region
    $region26: #{tpu_custom_call.1} parent=1 // pred_check
      _
    $region27: #{tpu_custom_call.1} parent=1 // pred_check_branch
      %32 = sbr.rel (0) target = $region29
    $region28: #{tpu_custom_call.1} parent=1 // pred_region
      _
    $region29: #{tpu_custom_call.1} parent=1 // pred_fallthru
      _
    // Predicated region
    $region30: #{tpu_custom_call.1} parent=1 // pred_check
      _
    $region31: #{tpu_custom_call.1} parent=1 // pred_check_branch
      %34 = sbr.rel (0) target = $region33
    $region32: #{tpu_custom_call.1} parent=1 // pred_region
      _
    $region33: #{tpu_custom_call.1} parent=1 // pred_fallthru
      _
    // Predicated region
    $region34: #{tpu_custom_call.1} parent=1 // pred_check
      _
    $region35: #{tpu_custom_call.1} parent=1 // pred_check_branch
      %36 = sbr.rel (0) target = $region37
    $region36: #{tpu_custom_call.1} parent=1 // pred_region
      _
    $region37: #{tpu_custom_call.1} parent=1 // pred_fallthru
      _
    // Predicated region
    $region38: #{tpu_custom_call.1} parent=1 // pred_check
      _
    $region39: #{tpu_custom_call.1} parent=1 // pred_check_branch
      %38 = sbr.rel (0) target = $region41
    $region40: #{tpu_custom_call.1} parent=1 // pred_region
      _
    $region41: #{tpu_custom_call.1} parent=1 // pred_fallthru
      _
    // Predicated region
    $region42: #{tpu_custom_call.1} parent=1 // pred_check
      _
    $region43: #{tpu_custom_call.1} parent=1 // pred_check_branch
      %40 = sbr.rel (0) target = $region45
    $region44: #{tpu_custom_call.1} parent=1 // pred_region
      _
    $region45: #{tpu_custom_call.1} parent=1 // pred_fallthru
      _
    %v41 = vld [vmem:[%s1] sm:$0xff]
    %v42 = vld [vmem:[%s1 + $0x8] sm:$0xff]
    %v43 = vld [vmem:[%s1 + $0x10] sm:$0xff]
    %v44 = vld [vmem:[%s1 + $0x18] sm:$0xff]
    %v45 = vld [vmem:[%s1 + $0x20] sm:$0x1]
    %v46 = vld [vmem:[%s1 + $0x28] sm:$0x1]
    %v47 = vld [vmem:[%s1 + $0x30] sm:$0x1]
    %v48 = vld [vmem:[%s1 + $0x38] sm:$0x1]
    %v49 = vld [vmem:[%s0] sm:$0xff]
    %v50 = vld [vmem:[%s0 + $0x8] sm:$0xff]
    %v51 = vld [vmem:[%s0 + $0x10] sm:$0xff]
    %v52 = vld [vmem:[%s0 + $0x18] sm:$0xff]
    %53 = vrot.lane.b32.xlu0 %v49, 17
    %v54 = vpop.permute.xlu0 %53
    %55 = vrot.lane.b32.xlu0 %v50, 17
    %v56 = vpop.permute.xlu0 %55
    %57 = vrot.lane.b32.xlu0 %v51, 17
    %v58 = vpop.permute.xlu0 %57
    %59 = vrot.lane.b32.xlu0 %v52, 17
    %v60 = vpop.permute.xlu0 %59
    %v61 = vlaneseq
    %v62 = vand.u32 %v61, 127
    %vm63 = vcmp.lt.s32.totalorder %v62, 17
    %v64 = vsel %vm63, %v58, %v60
    %v65 = vsel %vm63, %v56, %v58
    %v66 = vsel %vm63, %v54, %v56
    %v67 = vsel %vm63, %v60, %v54
    %v68 = vlaneseq
    %v69 = vshrl.u32 %v68, 7
    %v70 = vsub.s32 0, %v69
    %v71 = vrot.slane %v41, %v70
    %v72 = vlaneseq
    %v73 = vshrl.u32 %v72, 7
    %v74 = vsub.s32 0, %v73
    %v75 = vrot.slane %v42, %v74
    %v76 = vlaneseq
    %v77 = vshrl.u32 %v76, 7
    %v78 = vsub.s32 0, %v77
    %v79 = vrot.slane %v43, %v78
    %v80 = vlaneseq
    %v81 = vshrl.u32 %v80, 7
    %v82 = vsub.s32 0, %v81
    %v83 = vrot.slane %v44, %v82
    %v84 = vmul.f32 %v67, %v71
    %v85 = vmul.f32 %v66, %v75
    %v86 = vmul.f32 %v65, %v79
    %v87 = vmul.f32 %v64, %v83
    %88 = vrot.lane.b32.xlu0 %v49, 16
    %v89 = vpop.permute.xlu0 %88
    %90 = vrot.lane.b32.xlu0 %v50, 16
    %v91 = vpop.permute.xlu0 %90
    %92 = vrot.lane.b32.xlu0 %v51, 16
    %v93 = vpop.permute.xlu0 %92
    %94 = vrot.lane.b32.xlu0 %v52, 16
    %v95 = vpop.permute.xlu0 %94
    %vm96 = vcmp.lt.s32.totalorder %v62, 16
    %v97 = vsel %vm96, %v93, %v95
    %v98 = vsel %vm96, %v91, %v93
    %v99 = vsel %vm96, %v89, %v91
    %v100 = vsel %vm96, %v95, %v89
    %v101 = vlaneseq
    %v102 = vshrl.u32 %v101, 7
    %v103 = vsub.s32 1, %v102
    %v104 = vrot.slane %v41, %v103
    %v105 = vlaneseq
    %v106 = vshrl.u32 %v105, 7
    %v107 = vsub.s32 1, %v106
    %v108 = vrot.slane %v42, %v107
    %v109 = vlaneseq
    %v110 = vshrl.u32 %v109, 7
    %v111 = vsub.s32 1, %v110
    %v112 = vrot.slane %v43, %v111
    %v113 = vlaneseq
    %v114 = vshrl.u32 %v113, 7
    %v115 = vsub.s32 1, %v114
    %v116 = vrot.slane %v44, %v115
    %v117 = vmul.f32 %v100, %v104
    %v118 = vmul.f32 %v99, %v108
    %v119 = vmul.f32 %v98, %v112
    %v120 = vmul.f32 %v97, %v116
    %121 = vrot.lane.b32.xlu0 %v49, 15
    %v122 = vpop.permute.xlu0 %121
    %123 = vrot.lane.b32.xlu0 %v50, 15
    %v124 = vpop.permute.xlu0 %123
    %125 = vrot.lane.b32.xlu0 %v51, 15
    %v126 = vpop.permute.xlu0 %125
    %127 = vrot.lane.b32.xlu0 %v52, 15
    %v128 = vpop.permute.xlu0 %127
    %vm129 = vcmp.lt.s32.totalorder %v62, 15
    %v130 = vsel %vm129, %v126, %v128
    %v131 = vsel %vm129, %v124, %v126
    %v132 = vsel %vm129, %v122, %v124
    %v133 = vsel %vm129, %v128, %v122
    %v134 = vlaneseq
    %v135 = vshrl.u32 %v134, 7
    %v136 = vsub.s32 2, %v135
    %v137 = vrot.slane %v41, %v136
    %v138 = vlaneseq
    %v139 = vshrl.u32 %v138, 7
    %v140 = vsub.s32 2, %v139
    %v141 = vrot.slane %v42, %v140
    %v142 = vlaneseq
    %v143 = vshrl.u32 %v142, 7
    %v144 = vsub.s32 2, %v143
    %v145 = vrot.slane %v43, %v144
    %v146 = vlaneseq
    %v147 = vshrl.u32 %v146, 7
    %v148 = vsub.s32 2, %v147
    %v149 = vrot.slane %v44, %v148
    %v150 = vmul.f32 %v133, %v137
    %v151 = vmul.f32 %v132, %v141
    %v152 = vmul.f32 %v131, %v145
    %v153 = vmul.f32 %v130, %v149
    %154 = vrot.lane.b32.xlu0 %v49, 1
    %v155 = vpop.permute.xlu0 %154
    %156 = vrot.lane.b32.xlu0 %v50, 1
    %v157 = vpop.permute.xlu0 %156
    %158 = vrot.lane.b32.xlu0 %v51, 1
    %v159 = vpop.permute.xlu0 %158
    %160 = vrot.lane.b32.xlu0 %v52, 1
    %v161 = vpop.permute.xlu0 %160
    %vm162 = vcmp.lt.s32.totalorder %v62, 1
    %v163 = vsel %vm162, %v159, %v161
    %v164 = vsel %vm162, %v157, %v159
    %v165 = vsel %vm162, %v155, %v157
    %v166 = vsel %vm162, %v161, %v155
    %v167 = vlaneseq
    %v168 = vshrl.u32 %v167, 7
    %v169 = vsub.s32 3, %v168
    %v170 = vrot.slane %v41, %v169
    %v171 = vlaneseq
    %v172 = vshrl.u32 %v171, 7
    %v173 = vsub.s32 3, %v172
    %v174 = vrot.slane %v42, %v173
    %v175 = vlaneseq
    %v176 = vshrl.u32 %v175, 7
    %v177 = vsub.s32 3, %v176
    %v178 = vrot.slane %v43, %v177
    %v179 = vlaneseq
    %v180 = vshrl.u32 %v179, 7
    %v181 = vsub.s32 3, %v180
    %v182 = vrot.slane %v44, %v181
    %v183 = vmul.f32 %v166, %v170
    %v184 = vmul.f32 %v165, %v174
    %v185 = vmul.f32 %v164, %v178
    %v186 = vmul.f32 %v163, %v182
    %187 = vrot.lane.b32.xlu0 %v49, 127
    %v188 = vpop.permute.xlu0 %187
    %189 = vrot.lane.b32.xlu0 %v50, 127
    %v190 = vpop.permute.xlu0 %189
    %191 = vrot.lane.b32.xlu0 %v51, 127
    %v192 = vpop.permute.xlu0 %191
    %193 = vrot.lane.b32.xlu0 %v52, 127
    %v194 = vpop.permute.xlu0 %193
    %vm195 = vcmp.lt.s32.totalorder %v62, 127
    %v196 = vsel %vm195, %v192, %v194
    %v197 = vsel %vm195, %v190, %v192
    %v198 = vsel %vm195, %v188, %v190
    %v199 = vsel %vm195, %v194, %v188
    %v200 = vlaneseq
    %v201 = vshrl.u32 %v200, 7
    %v202 = vsub.s32 5, %v201
    %v203 = vrot.slane %v41, %v202
    %v204 = vlaneseq
    %v205 = vshrl.u32 %v204, 7
    %v206 = vsub.s32 5, %v205
    %v207 = vrot.slane %v42, %v206
    %v208 = vlaneseq
    %v209 = vshrl.u32 %v208, 7
    %v210 = vsub.s32 5, %v209
    %v211 = vrot.slane %v43, %v210
    %v212 = vlaneseq
    %v213 = vshrl.u32 %v212, 7
    %v214 = vsub.s32 5, %v213
    %v215 = vrot.slane %v44, %v214
    %v216 = vmul.f32 %v198, %v203
    %v217 = vmul.f32 %v197, %v207
    %v218 = vmul.f32 %v196, %v211
    %v219 = vmul.f32 %v199, %v215
    %220 = vrot.lane.b32.xlu0 %v49, 113
    %v221 = vpop.permute.xlu0 %220
    %222 = vrot.lane.b32.xlu0 %v50, 113
    %v223 = vpop.permute.xlu0 %222
    %224 = vrot.lane.b32.xlu0 %v51, 113
    %v225 = vpop.permute.xlu0 %224
    %226 = vrot.lane.b32.xlu0 %v52, 113
    %v227 = vpop.permute.xlu0 %226
    %vm228 = vcmp.lt.s32.totalorder %v62, 113
    %v229 = vsel %vm228, %v225, %v227
    %v230 = vsel %vm228, %v223, %v225
    %v231 = vsel %vm228, %v221, %v223
    %v232 = vsel %vm228, %v227, %v221
    %v233 = vlaneseq
    %v234 = vshrl.u32 %v233, 7
    %v235 = vsub.s32 6, %v234
    %v236 = vrot.slane %v41, %v235
    %v237 = vlaneseq
    %v238 = vshrl.u32 %v237, 7
    %v239 = vsub.s32 6, %v238
    %v240 = vrot.slane %v42, %v239
    %v241 = vlaneseq
    %v242 = vshrl.u32 %v241, 7
    %v243 = vsub.s32 6, %v242
    %v244 = vrot.slane %v43, %v243
    %v245 = vlaneseq
    %v246 = vshrl.u32 %v245, 7
    %v247 = vsub.s32 6, %v246
    %v248 = vrot.slane %v44, %v247
    %v249 = vmul.f32 %v231, %v236
    %v250 = vmul.f32 %v230, %v240
    %v251 = vmul.f32 %v229, %v244
    %v252 = vmul.f32 %v232, %v248
    %253 = vrot.lane.b32.xlu0 %v49, 112
    %v254 = vpop.permute.xlu0 %253
    %255 = vrot.lane.b32.xlu0 %v50, 112
    %v256 = vpop.permute.xlu0 %255
    %257 = vrot.lane.b32.xlu0 %v51, 112
    %v258 = vpop.permute.xlu0 %257
    %259 = vrot.lane.b32.xlu0 %v52, 112
    %v260 = vpop.permute.xlu0 %259
    %vm261 = vcmp.lt.s32.totalorder %v62, 112
    %v262 = vsel %vm261, %v258, %v260
    %v263 = vsel %vm261, %v256, %v258
    %v264 = vsel %vm261, %v254, %v256
    %v265 = vsel %vm261, %v260, %v254
    %v266 = vlaneseq
    %v267 = vshrl.u32 %v266, 7
    %v268 = vsub.s32 7, %v267
    %v269 = vrot.slane %v41, %v268
    %v270 = vlaneseq
    %v271 = vshrl.u32 %v270, 7
    %v272 = vsub.s32 7, %v271
    %v273 = vrot.slane %v42, %v272
    %v274 = vlaneseq
    %v275 = vshrl.u32 %v274, 7
    %v276 = vsub.s32 7, %v275
    %v277 = vrot.slane %v43, %v276
    %v278 = vlaneseq
    %v279 = vshrl.u32 %v278, 7
    %v280 = vsub.s32 7, %v279
    %v281 = vrot.slane %v44, %v280
    %v282 = vmul.f32 %v264, %v269
    %v283 = vmul.f32 %v263, %v273
    %v284 = vmul.f32 %v262, %v277
    %v285 = vmul.f32 %v265, %v281
    %286 = vrot.lane.b32.xlu0 %v49, 111
    %v287 = vpop.permute.xlu0 %286
    %288 = vrot.lane.b32.xlu0 %v50, 111
    %v289 = vpop.permute.xlu0 %288
    %290 = vrot.lane.b32.xlu0 %v51, 111
    %v291 = vpop.permute.xlu0 %290
    %292 = vrot.lane.b32.xlu0 %v52, 111
    %v293 = vpop.permute.xlu0 %292
    %vm294 = vcmp.lt.s32.totalorder %v62, 111
    %v295 = vsel %vm294, %v291, %v293
    %v296 = vsel %vm294, %v289, %v291
    %v297 = vsel %vm294, %v287, %v289
    %v298 = vsel %vm294, %v293, %v287
    %v299 = vlaneseq
    %v300 = vshrl.u32 %v299, 7
    %v301 = vsub.s32 0, %v300
    %v302 = vrot.slane %v45, %v301
    %v303 = vlaneseq
    %v304 = vshrl.u32 %v303, 7
    %v305 = vsub.s32 0, %v304
    %v306 = vrot.slane %v46, %v305
    %v307 = vlaneseq
    %v308 = vshrl.u32 %v307, 7
    %v309 = vsub.s32 0, %v308
    %v310 = vrot.slane %v47, %v309
    %v311 = vlaneseq
    %v312 = vshrl.u32 %v311, 7
    %v313 = vsub.s32 0, %v312
    %v314 = vrot.slane %v48, %v313
    %v315 = vmul.f32 %v297, %v302
    %v316 = vmul.f32 %v296, %v306
    %v317 = vmul.f32 %v295, %v310
    %v318 = vmul.f32 %v298, %v314
    %v319 = vld [vmem:[%s3] sm:$0xff]
    %v320 = vld [vmem:[%s4] sm:$0xff]
    %322 = vset.pattern.permute.xlu0 0
    %323 = vperm.xlu0 %322, %v320
    %v324 = vpop.permute.xlu0 %323
    %vm326 = vcmask 588800
    %v328 = vsel %vm326, %v319, 0
    %330 = vmatprep.subr.mxu0 0.0
    %331 = vmatpush1.msra.mxu0 0.0
    %332 = vmatprep.subr.mxu0 0.0
    %333 = vmatpush1.msra.mxu0 0.0
    %334 = vmatprep.subr.mxu0 0.0
    %335 = vmatpush1.msra.mxu0 0.0
    %336 = vmatprep.subr.mxu0 0.0
    %337 = vmatpush1.msra.mxu0 0.0
    %338 = vmatprep.subr.mxu0 0.0
    %339 = vmatpush1.msra.mxu0 0.0
    %340 = vmatprep.subr.mxu0 0.0
    %341 = vmatpush1.msra.mxu0 0.0
    %342 = vmatprep.subr.mxu0 0.0
    %343 = vmatpush1.msra.mxu0 0.0
    %344 = vmatprep.subr.mxu0 %v316
    %345 = vmatpush1.msra.mxu0 %v315
    %346 = vmatprep.subr.mxu0 %v283
    %347 = vmatpush1.msra.mxu0 %v282
    %348 = vmatprep.subr.mxu0 %v250
    %349 = vmatpush1.msra.mxu0 %v249
    %350 = vmatprep.subr.mxu0 %v217
    %351 = vmatpush1.msra.mxu0 %v216
    %352 = vmatprep.subr.mxu0 %v50
    %353 = vmatpush1.msra.mxu0 %v49
    %354 = vmatprep.subr.mxu0 %v184
    %355 = vmatpush1.msra.mxu0 %v183
    %356 = vmatprep.subr.mxu0 %v151
    %357 = vmatpush1.msra.mxu0 %v150
    %358 = vmatprep.subr.mxu0 %v118
    %359 = vmatpush1.msra.mxu0 %v117
    %360 = vmatprep.subr.mxu0 %v85
    %361 = vmatpush1.msra.mxu0 %v84
    %362 = vmatprep.subr.mxu0 0.0
    %363 = vmatpush2.msra.mxu0 0.0
    %364 = vmatprep.subr.mxu0 0.0
    %365 = vmatpush2.msra.mxu0 0.0
    %366 = vmatprep.subr.mxu0 0.0
    %367 = vmatpush2.msra.mxu0 0.0
    %368 = vmatprep.subr.mxu0 0.0
    %369 = vmatpush2.msra.mxu0 0.0
    %370 = vmatprep.subr.mxu0 0.0
    %371 = vmatpush2.msra.mxu0 0.0
    %372 = vmatprep.subr.mxu0 0.0
    %373 = vmatpush2.msra.mxu0 0.0
    %374 = vmatprep.subr.mxu0 0.0
    %375 = vmatpush2.msra.mxu0 0.0
    %376 = vmatprep.subr.mxu0 0.0
    %377 = vmatpush2.msra.mxu0 0.0
    %378 = vmatprep.subr.mxu0 0.0
    %379 = vmatpush2.msra.mxu0 0.0
    %380 = vmatprep.subr.mxu0 0.0
    %381 = vmatpush2.msra.mxu0 0.0
    %382 = vmatprep.subr.mxu0 0.0
    %383 = vmatpush2.msra.mxu0 0.0
    %384 = vmatprep.subr.mxu0 0.0
    %385 = vmatpush2.msra.mxu0 0.0
    %386 = vmatprep.subr.mxu0 0.0
    %387 = vmatpush2.msra.mxu0 0.0
    %388 = vmatprep.subr.mxu0 0.0
    %389 = vmatpush2.msra.mxu0 0.0
    %390 = vmatprep.subr.mxu0 0.0
    %391 = vmatpush2.msra.mxu0 0.0
    %392 = vmatprep.subr.mxu0 0.0
    %393 = vmatpush2.msra.mxu0 0.0
    %394 = vmatprep.mubr.f32.mxu0 0.0
    %395 = vmatmul.mubr.f32.gmra.mxu0 %v328
    %v396 = vpop.f32.mrf.mxu0
    %v397 = vadd.f32 %v324, %v396
    %v398 = vpop.f32.mrf.mxu0
    %v399 = vadd.f32 %v324, %v398
    %400 = vdwg.mxu0
    %401 = vmatprep.subr.mxu0 0.0
    %402 = vmatpush1.msra.mxu0 0.0
    %403 = vmatprep.subr.mxu0 0.0
    %404 = vmatpush1.msra.mxu0 0.0
    %405 = vmatprep.subr.mxu0 0.0
    %406 = vmatpush1.msra.mxu0 0.0
    %407 = vmatprep.subr.mxu0 0.0
    %408 = vmatpush1.msra.mxu0 0.0
    %409 = vmatprep.subr.mxu0 0.0
    %410 = vmatpush1.msra.mxu0 0.0
    %411 = vmatprep.subr.mxu0 0.0
    %412 = vmatpush1.msra.mxu0 0.0
    %413 = vmatprep.subr.mxu0 0.0
    %414 = vmatpush1.msra.mxu0 0.0
    %415 = vmatprep.subr.mxu0 %v318
    %416 = vmatpush1.msra.mxu0 %v317
    %417 = vmatprep.subr.mxu0 %v285
    %418 = vmatpush1.msra.mxu0 %v284
    %419 = vmatprep.subr.mxu0 %v252
    %420 = vmatpush1.msra.mxu0 %v251
    %421 = vmatprep.subr.mxu0 %v219
    %422 = vmatpush1.msra.mxu0 %v218
    %423 = vmatprep.subr.mxu0 %v52
    %424 = vmatpush1.msra.mxu0 %v51
    %425 = vmatprep.subr.mxu0 %v186
    %426 = vmatpush1.msra.mxu0 %v185
    %427 = vmatprep.subr.mxu0 %v153
    %428 = vmatpush1.msra.mxu0 %v152
    %429 = vmatprep.subr.mxu0 %v120
    %430 = vmatpush1.msra.mxu0 %v119
    %431 = vmatprep.subr.mxu0 %v87
    %432 = vmatpush1.msra.mxu0 %v86
    %433 = vmatprep.subr.mxu0 0.0
    %434 = vmatpush2.msra.mxu0 0.0
    %435 = vmatprep.subr.mxu0 0.0
    %436 = vmatpush2.msra.mxu0 0.0
    %437 = vmatprep.subr.mxu0 0.0
    %438 = vmatpush2.msra.mxu0 0.0
    %439 = vmatprep.subr.mxu0 0.0
    %440 = vmatpush2.msra.mxu0 0.0
    %441 = vmatprep.subr.mxu0 0.0
    %442 = vmatpush2.msra.mxu0 0.0
    %443 = vmatprep.subr.mxu0 0.0
    %444 = vmatpush2.msra.mxu0 0.0
    %445 = vmatprep.subr.mxu0 0.0
    %446 = vmatpush2.msra.mxu0 0.0
    %447 = vmatprep.subr.mxu0 0.0
    %448 = vmatpush2.msra.mxu0 0.0
    %449 = vmatprep.subr.mxu0 0.0
    %450 = vmatpush2.msra.mxu0 0.0
    %451 = vmatprep.subr.mxu0 0.0
    %452 = vmatpush2.msra.mxu0 0.0
    %453 = vmatprep.subr.mxu0 0.0
    %454 = vmatpush2.msra.mxu0 0.0
    %455 = vmatprep.subr.mxu0 0.0
    %456 = vmatpush2.msra.mxu0 0.0
    %457 = vmatprep.subr.mxu0 0.0
    %458 = vmatpush2.msra.mxu0 0.0
    %459 = vmatprep.subr.mxu0 0.0
    %460 = vmatpush2.msra.mxu0 0.0
    %461 = vmatprep.subr.mxu0 0.0
    %462 = vmatpush2.msra.mxu0 0.0
    %463 = vmatprep.subr.mxu0 0.0
    %464 = vmatpush2.msra.mxu0 0.0
    %465 = vmatprep.mubr.f32.mxu0 0.0
    %466 = vmatmul.mubr.f32.gmra.mxu0 %v328
    %v467 = vpop.f32.mrf.mxu0
    %v468 = vadd.f32 %v324, %v467
    %v469 = vpop.f32.mrf.mxu0
    %v470 = vadd.f32 %v324, %v469
    %471 = vdwg.mxu0
    %v472 = vmax.f32 %v397, 0.0
    %v473 = vmax.f32 %v399, 0.0
    %v474 = vmax.f32 %v468, 0.0
    %v475 = vmax.f32 %v470, 0.0
    %476 = vrot.lane.b32.xlu0 %v472, 17
    %v477 = vpop.permute.xlu0 %476
    %478 = vrot.lane.b32.xlu0 %v473, 17
    %v479 = vpop.permute.xlu0 %478
    %480 = vrot.lane.b32.xlu0 %v474, 17
    %v481 = vpop.permute.xlu0 %480
    %482 = vrot.lane.b32.xlu0 %v475, 17
    %v483 = vpop.permute.xlu0 %482
    %v484 = vsel %vm63, %v481, %v483
    %v485 = vsel %vm63, %v479, %v481
    %v486 = vsel %vm63, %v477, %v479
    %v487 = vsel %vm63, %v483, %v477
    %v488 = vmul.f32 %v487, %v71
    %v489 = vmul.f32 %v486, %v75
    %v490 = vmul.f32 %v485, %v79
    %v491 = vmul.f32 %v484, %v83
    %492 = vrot.lane.b32.xlu0 %v472, 16
    %v493 = vpop.permute.xlu0 %492
    %494 = vrot.lane.b32.xlu0 %v473, 16
    %v495 = vpop.permute.xlu0 %494
    %496 = vrot.lane.b32.xlu0 %v474, 16
    %v497 = vpop.permute.xlu0 %496
    %498 = vrot.lane.b32.xlu0 %v475, 16
    %v499 = vpop.permute.xlu0 %498
    %v500 = vsel %vm96, %v497, %v499
    %v501 = vsel %vm96, %v495, %v497
    %v502 = vsel %vm96, %v493, %v495
    %v503 = vsel %vm96, %v499, %v493
    %v504 = vmul.f32 %v503, %v104
    %v505 = vmul.f32 %v502, %v108
    %v506 = vmul.f32 %v501, %v112
    %v507 = vmul.f32 %v500, %v116
    %508 = vrot.lane.b32.xlu0 %v472, 15
    %v509 = vpop.permute.xlu0 %508
    %510 = vrot.lane.b32.xlu0 %v473, 15
    %v511 = vpop.permute.xlu0 %510
    %512 = vrot.lane.b32.xlu0 %v474, 15
    %v513 = vpop.permute.xlu0 %512
    %514 = vrot.lane.b32.xlu0 %v475, 15
    %v515 = vpop.permute.xlu0 %514
    %v516 = vsel %vm129, %v513, %v515
    %v517 = vsel %vm129, %v511, %v513
    %v518 = vsel %vm129, %v509, %v511
    %v519 = vsel %vm129, %v515, %v509
    %v520 = vmul.f32 %v519, %v137
    %v521 = vmul.f32 %v518, %v141
    %v522 = vmul.f32 %v517, %v145
    %v523 = vmul.f32 %v516, %v149
    %524 = vrot.lane.b32.xlu0 %v472, 1
    %v525 = vpop.permute.xlu0 %524
    %526 = vrot.lane.b32.xlu0 %v473, 1
    %v527 = vpop.permute.xlu0 %526
    %528 = vrot.lane.b32.xlu0 %v474, 1
    %v529 = vpop.permute.xlu0 %528
    %530 = vrot.lane.b32.xlu0 %v475, 1
    %v531 = vpop.permute.xlu0 %530
    %v532 = vsel %vm162, %v529, %v531
    %v533 = vsel %vm162, %v527, %v529
    %v534 = vsel %vm162, %v525, %v527
    %v535 = vsel %vm162, %v531, %v525
    %v536 = vmul.f32 %v535, %v170
    %v537 = vmul.f32 %v534, %v174
    %v538 = vmul.f32 %v533, %v178
    %v539 = vmul.f32 %v532, %v182
    %540 = vrot.lane.b32.xlu0 %v472, 127
    %v541 = vpop.permute.xlu0 %540
    %542 = vrot.lane.b32.xlu0 %v473, 127
    %v543 = vpop.permute.xlu0 %542
    %544 = vrot.lane.b32.xlu0 %v474, 127
    %v545 = vpop.permute.xlu0 %544
    %546 = vrot.lane.b32.xlu0 %v475, 127
    %v547 = vpop.permute.xlu0 %546
    %v548 = vsel %vm195, %v545, %v547
    %v549 = vsel %vm195, %v543, %v545
    %v550 = vsel %vm195, %v541, %v543
    %v551 = vsel %vm195, %v547, %v541
    %v552 = vmul.f32 %v550, %v203
    %v553 = vmul.f32 %v549, %v207
    %v554 = vmul.f32 %v548, %v211
    %v555 = vmul.f32 %v551, %v215
    %556 = vrot.lane.b32.xlu0 %v472, 113
    %v557 = vpop.permute.xlu0 %556
    %558 = vrot.lane.b32.xlu0 %v473, 113
    %v559 = vpop.permute.xlu0 %558
    %560 = vrot.lane.b32.xlu0 %v474, 113
    %v561 = vpop.permute.xlu0 %560
    %562 = vrot.lane.b32.xlu0 %v475, 113
    %v563 = vpop.permute.xlu0 %562
    %v564 = vsel %vm228, %v561, %v563
    %v565 = vsel %vm228, %v559, %v561
    %v566 = vsel %vm228, %v557, %v559
    %v567 = vsel %vm228, %v563, %v557
    %v568 = vmul.f32 %v566, %v236
    %v569 = vmul.f32 %v565, %v240
    %v570 = vmul.f32 %v564, %v244
    %v571 = vmul.f32 %v567, %v248
    %572 = vrot.lane.b32.xlu0 %v472, 112
    %v573 = vpop.permute.xlu0 %572
    %574 = vrot.lane.b32.xlu0 %v473, 112
    %v575 = vpop.permute.xlu0 %574
    %576 = vrot.lane.b32.xlu0 %v474, 112
    %v577 = vpop.permute.xlu0 %576
    %578 = vrot.lane.b32.xlu0 %v475, 112
    %v579 = vpop.permute.xlu0 %578
    %v580 = vsel %vm261, %v577, %v579
    %v581 = vsel %vm261, %v575, %v577
    %v582 = vsel %vm261, %v573, %v575
    %v583 = vsel %vm261, %v579, %v573
    %v584 = vmul.f32 %v582, %v269
    %v585 = vmul.f32 %v581, %v273
    %v586 = vmul.f32 %v580, %v277
    %v587 = vmul.f32 %v583, %v281
    %588 = vrot.lane.b32.xlu0 %v472, 111
    %v589 = vpop.permute.xlu0 %588
    %590 = vrot.lane.b32.xlu0 %v473, 111
    %v591 = vpop.permute.xlu0 %590
    %592 = vrot.lane.b32.xlu0 %v474, 111
    %v593 = vpop.permute.xlu0 %592
    %594 = vrot.lane.b32.xlu0 %v475, 111
    %v595 = vpop.permute.xlu0 %594
    %v596 = vsel %vm294, %v593, %v595
    %v597 = vsel %vm294, %v591, %v593
    %v598 = vsel %vm294, %v589, %v591
    %v599 = vsel %vm294, %v595, %v589
    %v600 = vmul.f32 %v598, %v302
    %v601 = vmul.f32 %v597, %v306
    %v602 = vmul.f32 %v596, %v310
    %v603 = vmul.f32 %v599, %v314
    %v604 = vld [vmem:[%s5] sm:$0xff]
    %v605 = vld [vmem:[%s5 + $0x8] sm:$0xff]
    %v606 = vld [vmem:[%s6] sm:$0xff]
    %v607 = vld [vmem:[%s6 + $0x8] sm:$0xff]
    %609 = vset.pattern.permute.xlu0 0
    %610 = vperm.xlu0 %609, %v606
    %v611 = vpop.permute.xlu0 %610
    %614 = vset.pattern.permute.xlu0 0
    %615 = vperm.xlu0 %614, %v607
    %v616 = vpop.permute.xlu0 %615
    %v619 = vsel %vm326, %v604, 0
    %v622 = vsel %vm326, %v605, 0
    %624 = vmatprep.subr.mxu0 0.0
    %625 = vmatpush1.msra.mxu0 0.0
    %626 = vmatprep.subr.mxu0 0.0
    %627 = vmatpush1.msra.mxu0 0.0
    %628 = vmatprep.subr.mxu0 0.0
    %629 = vmatpush1.msra.mxu0 0.0
    %630 = vmatprep.subr.mxu0 0.0
    %631 = vmatpush1.msra.mxu0 0.0
    %632 = vmatprep.subr.mxu0 0.0
    %633 = vmatpush1.msra.mxu0 0.0
    %634 = vmatprep.subr.mxu0 0.0
    %635 = vmatpush1.msra.mxu0 0.0
    %636 = vmatprep.subr.mxu0 0.0
    %637 = vmatpush1.msra.mxu0 0.0
    %638 = vmatprep.subr.mxu0 %v601
    %639 = vmatpush1.msra.mxu0 %v600
    %640 = vmatprep.subr.mxu0 %v585
    %641 = vmatpush1.msra.mxu0 %v584
    %642 = vmatprep.subr.mxu0 %v569
    %643 = vmatpush1.msra.mxu0 %v568
    %644 = vmatprep.subr.mxu0 %v553
    %645 = vmatpush1.msra.mxu0 %v552
    %646 = vmatprep.subr.mxu0 %v473
    %647 = vmatpush1.msra.mxu0 %v472
    %648 = vmatprep.subr.mxu0 %v537
    %649 = vmatpush1.msra.mxu0 %v536
    %650 = vmatprep.subr.mxu0 %v521
    %651 = vmatpush1.msra.mxu0 %v520
    %652 = vmatprep.subr.mxu0 %v505
    %653 = vmatpush1.msra.mxu0 %v504
    %654 = vmatprep.subr.mxu0 %v489
    %655 = vmatpush1.msra.mxu0 %v488
    %656 = vmatprep.subr.mxu0 0.0
    %657 = vmatpush2.msra.mxu0 0.0
    %658 = vmatprep.subr.mxu0 0.0
    %659 = vmatpush2.msra.mxu0 0.0
    %660 = vmatprep.subr.mxu0 0.0
    %661 = vmatpush2.msra.mxu0 0.0
    %662 = vmatprep.subr.mxu0 0.0
    %663 = vmatpush2.msra.mxu0 0.0
    %664 = vmatprep.subr.mxu0 0.0
    %665 = vmatpush2.msra.mxu0 0.0
    %666 = vmatprep.subr.mxu0 0.0
    %667 = vmatpush2.msra.mxu0 0.0
    %668 = vmatprep.subr.mxu0 0.0
    %669 = vmatpush2.msra.mxu0 0.0
    %670 = vmatprep.subr.mxu0 0.0
    %671 = vmatpush2.msra.mxu0 0.0
    %672 = vmatprep.subr.mxu0 0.0
    %673 = vmatpush2.msra.mxu0 0.0
    %674 = vmatprep.subr.mxu0 0.0
    %675 = vmatpush2.msra.mxu0 0.0
    %676 = vmatprep.subr.mxu0 0.0
    %677 = vmatpush2.msra.mxu0 0.0
    %678 = vmatprep.subr.mxu0 0.0
    %679 = vmatpush2.msra.mxu0 0.0
    %680 = vmatprep.subr.mxu0 0.0
    %681 = vmatpush2.msra.mxu0 0.0
    %682 = vmatprep.subr.mxu0 0.0
    %683 = vmatpush2.msra.mxu0 0.0
    %684 = vmatprep.subr.mxu0 0.0
    %685 = vmatpush2.msra.mxu0 0.0
    %686 = vmatprep.subr.mxu0 0.0
    %687 = vmatpush2.msra.mxu0 0.0
    %688 = vmatprep.mubr.f32.mxu0 0.0
    %689 = vmatmul.mubr.f32.gmra.mxu0 %v619
    %v690 = vpop.f32.mrf.mxu0
    %v691 = vadd.f32 %v611, %v690
    %v692 = vpop.f32.mrf.mxu0
    %v693 = vadd.f32 %v611, %v692
    %694 = vmatprep.mubr.f32.mxu0 0.0
    %695 = vmatmul.mubr.f32.gmra.mxu0 %v622
    %v696 = vpop.f32.mrf.mxu0
    %v697 = vadd.f32 %v616, %v696
    %v698 = vpop.f32.mrf.mxu0
    %v699 = vadd.f32 %v616, %v698
    %700 = vdwg.mxu0
    %701 = vmatprep.subr.mxu0 0.0
    %702 = vmatpush1.msra.mxu0 0.0
    %703 = vmatprep.subr.mxu0 0.0
    %704 = vmatpush1.msra.mxu0 0.0
    %705 = vmatprep.subr.mxu0 0.0
    %706 = vmatpush1.msra.mxu0 0.0
    %707 = vmatprep.subr.mxu0 0.0
    %708 = vmatpush1.msra.mxu0 0.0
    %709 = vmatprep.subr.mxu0 0.0
    %710 = vmatpush1.msra.mxu0 0.0
    %711 = vmatprep.subr.mxu0 0.0
    %712 = vmatpush1.msra.mxu0 0.0
    %713 = vmatprep.subr.mxu0 0.0
    %714 = vmatpush1.msra.mxu0 0.0
    %715 = vmatprep.subr.mxu0 %v603
    %716 = vmatpush1.msra.mxu0 %v602
    %717 = vmatprep.subr.mxu0 %v587
    %718 = vmatpush1.msra.mxu0 %v586
    %719 = vmatprep.subr.mxu0 %v571
    %720 = vmatpush1.msra.mxu0 %v570
    %721 = vmatprep.subr.mxu0 %v555
    %722 = vmatpush1.msra.mxu0 %v554
    %723 = vmatprep.subr.mxu0 %v475
    %724 = vmatpush1.msra.mxu0 %v474
    %725 = vmatprep.subr.mxu0 %v539
    %726 = vmatpush1.msra.mxu0 %v538
    %727 = vmatprep.subr.mxu0 %v523
    %728 = vmatpush1.msra.mxu0 %v522
    %729 = vmatprep.subr.mxu0 %v507
    %730 = vmatpush1.msra.mxu0 %v506
    %731 = vmatprep.subr.mxu0 %v491
    %732 = vmatpush1.msra.mxu0 %v490
    %733 = vmatprep.subr.mxu0 0.0
    %734 = vmatpush2.msra.mxu0 0.0
    %735 = vmatprep.subr.mxu0 0.0
    %736 = vmatpush2.msra.mxu0 0.0
    %737 = vmatprep.subr.mxu0 0.0
    %738 = vmatpush2.msra.mxu0 0.0
    %739 = vmatprep.subr.mxu0 0.0
    %740 = vmatpush2.msra.mxu0 0.0
    %741 = vmatprep.subr.mxu0 0.0
    %742 = vmatpush2.msra.mxu0 0.0
    %743 = vmatprep.subr.mxu0 0.0
    %744 = vmatpush2.msra.mxu0 0.0
    %745 = vmatprep.subr.mxu0 0.0
    %746 = vmatpush2.msra.mxu0 0.0
    %747 = vmatprep.subr.mxu0 0.0
    %748 = vmatpush2.msra.mxu0 0.0
    %749 = vmatprep.subr.mxu0 0.0
    %750 = vmatpush2.msra.mxu0 0.0
    %751 = vmatprep.subr.mxu0 0.0
    %752 = vmatpush2.msra.mxu0 0.0
    %753 = vmatprep.subr.mxu0 0.0
    %754 = vmatpush2.msra.mxu0 0.0
    %755 = vmatprep.subr.mxu0 0.0
    %756 = vmatpush2.msra.mxu0 0.0
    %757 = vmatprep.subr.mxu0 0.0
    %758 = vmatpush2.msra.mxu0 0.0
    %759 = vmatprep.subr.mxu0 0.0
    %760 = vmatpush2.msra.mxu0 0.0
    %761 = vmatprep.subr.mxu0 0.0
    %762 = vmatpush2.msra.mxu0 0.0
    %763 = vmatprep.subr.mxu0 0.0
    %764 = vmatpush2.msra.mxu0 0.0
    %765 = vmatprep.mubr.f32.mxu0 0.0
    %766 = vmatmul.mubr.f32.gmra.mxu0 %v619
    %v767 = vpop.f32.mrf.mxu0
    %v768 = vadd.f32 %v611, %v767
    %v769 = vpop.f32.mrf.mxu0
    %v770 = vadd.f32 %v611, %v769
    %771 = vmatprep.mubr.f32.mxu0 0.0
    %772 = vmatmul.mubr.f32.gmra.mxu0 %v622
    %v773 = vpop.f32.mrf.mxu0
    %v774 = vadd.f32 %v616, %v773
    %v775 = vpop.f32.mrf.mxu0
    %v776 = vadd.f32 %v616, %v775
    %777 = vdwg.mxu0
    %v778 = vmax.f32 %v691, 0.0
    %v779 = vmax.f32 %v693, 0.0
    %v780 = vmax.f32 %v768, 0.0
    %v781 = vmax.f32 %v770, 0.0
    %v782 = vmax.f32 %v697, 0.0
    %v783 = vmax.f32 %v699, 0.0
    %v784 = vmax.f32 %v774, 0.0
    %v785 = vmax.f32 %v776, 0.0
    %v786 = vld [vmem:[%s2] sm:$0xff]
    %v787 = vld [vmem:[%s2 + $0x8] sm:$0xff]
    %v788 = vld [vmem:[%s2 + $0x10] sm:$0xff]
    %v789 = vld [vmem:[%s2 + $0x18] sm:$0xff]
    %v790 = vld [vmem:[%s2 + $0x20] sm:$0xff]
    %v791 = vld [vmem:[%s2 + $0x28] sm:$0xff]
    %v792 = vld [vmem:[%s2 + $0x30] sm:$0xff]
    %v793 = vld [vmem:[%s2 + $0x38] sm:$0xff]
    %v794 = vld [vmem:[%s2 + $0x40] sm:$0xff]
    %v795 = vld [vmem:[%s2 + $0x48] sm:$0xff]
    %v796 = vld [vmem:[%s2 + $0x50] sm:$0xff]
    %v797 = vld [vmem:[%s2 + $0x58] sm:$0xff]
    %v798 = vld [vmem:[%s2 + $0x60] sm:$0xff]
    %v799 = vld [vmem:[%s2 + $0x68] sm:$0xff]
    %v800 = vld [vmem:[%s2 + $0x70] sm:$0xff]
    %v801 = vld [vmem:[%s2 + $0x78] sm:$0xff]
    %v802 = vld [vmem:[%s2 + $0x80] sm:$0xff]
    %v803 = vld [vmem:[%s2 + $0x88] sm:$0xff]
    %v804 = vld [vmem:[%s2 + $0x90] sm:$0xff]
    %v805 = vld [vmem:[%s2 + $0x98] sm:$0xff]
    %v806 = vld [vmem:[%s2 + $0xa0] sm:$0xff]
    %v807 = vld [vmem:[%s2 + $0xa8] sm:$0xff]
    %v808 = vld [vmem:[%s2 + $0xb0] sm:$0xff]
    %v809 = vld [vmem:[%s2 + $0xb8] sm:$0xff]
    %v810 = vld [vmem:[%s2 + $0xc0] sm:$0xff]
    %v811 = vld [vmem:[%s2 + $0xc8] sm:$0xff]
    %v812 = vld [vmem:[%s2 + $0xd0] sm:$0xff]
    %v813 = vld [vmem:[%s2 + $0xd8] sm:$0xff]
    %v814 = vld [vmem:[%s2 + $0xe0] sm:$0xff]
    %v815 = vld [vmem:[%s2 + $0xe8] sm:$0xff]
    %v816 = vld [vmem:[%s2 + $0xf0] sm:$0xff]
    %v817 = vld [vmem:[%s2 + $0xf8] sm:$0xff]
    %v818 = vld [vmem:[%s2 + $0x100] sm:$0xff]
    %v819 = vld [vmem:[%s2 + $0x108] sm:$0xff]
    %v820 = vld [vmem:[%s2 + $0x110] sm:$0xff]
    %v821 = vld [vmem:[%s2 + $0x118] sm:$0xff]
    %v822 = vld [vmem:[%s2 + $0x120] sm:$0xff]
    %v823 = vld [vmem:[%s2 + $0x128] sm:$0xff]
    %v824 = vld [vmem:[%s2 + $0x130] sm:$0xff]
    %v825 = vld [vmem:[%s2 + $0x138] sm:$0xff]
    %v826 = vld [vmem:[%s2 + $0x140] sm:$0xff]
    %v827 = vld [vmem:[%s2 + $0x148] sm:$0xff]
    %v828 = vld [vmem:[%s2 + $0x150] sm:$0xff]
    %v829 = vld [vmem:[%s2 + $0x158] sm:$0xff]
    %v830 = vld [vmem:[%s2 + $0x160] sm:$0xff]
    %v831 = vld [vmem:[%s2 + $0x168] sm:$0xff]
    %v832 = vld [vmem:[%s2 + $0x170] sm:$0xff]
    %v833 = vld [vmem:[%s2 + $0x178] sm:$0xff]
    %v834 = vld [vmem:[%s2 + $0x180] sm:$0xff]
    %v835 = vld [vmem:[%s2 + $0x188] sm:$0xff]
    %v836 = vld [vmem:[%s2 + $0x190] sm:$0xff]
    %v837 = vld [vmem:[%s2 + $0x198] sm:$0xff]
    %v838 = vld [vmem:[%s2 + $0x1a0] sm:$0xff]
    %v839 = vld [vmem:[%s2 + $0x1a8] sm:$0xff]
    %v840 = vld [vmem:[%s2 + $0x1b0] sm:$0xff]
    %v841 = vld [vmem:[%s2 + $0x1b8] sm:$0xff]
    %v842 = vld [vmem:[%s2 + $0x1c0] sm:$0xff]
    %v843 = vld [vmem:[%s2 + $0x1c8] sm:$0xff]
    %v844 = vld [vmem:[%s2 + $0x1d0] sm:$0xff]
    %v845 = vld [vmem:[%s2 + $0x1d8] sm:$0xff]
    %v846 = vld [vmem:[%s2 + $0x1e0] sm:$0xff]
    %v847 = vld [vmem:[%s2 + $0x1e8] sm:$0xff]
    %v848 = vld [vmem:[%s2 + $0x1f0] sm:$0xff]
    %v849 = vld [vmem:[%s2 + $0x1f8] sm:$0xff]
    %850 = vmatprep.subr.mxu0 0.0
    %851 = vmatpush1.msra.mxu0 %v801
    %852 = vmatprep.subr.mxu0 0.0
    %853 = vmatpush1.msra.mxu0 %v800
    %854 = vmatprep.subr.mxu0 0.0
    %855 = vmatpush1.msra.mxu0 %v799
    %856 = vmatprep.subr.mxu0 0.0
    %857 = vmatpush1.msra.mxu0 %v798
    %858 = vmatprep.subr.mxu0 0.0
    %859 = vmatpush1.msra.mxu0 %v797
    %860 = vmatprep.subr.mxu0 0.0
    %861 = vmatpush1.msra.mxu0 %v796
    %862 = vmatprep.subr.mxu0 0.0
    %863 = vmatpush1.msra.mxu0 %v795
    %864 = vmatprep.subr.mxu0 0.0
    %865 = vmatpush1.msra.mxu0 %v794
    %866 = vmatprep.subr.mxu0 0.0
    %867 = vmatpush1.msra.mxu0 %v793
    %868 = vmatprep.subr.mxu0 0.0
    %869 = vmatpush1.msra.mxu0 %v792
    %870 = vmatprep.subr.mxu0 0.0
    %871 = vmatpush1.msra.mxu0 %v791
    %872 = vmatprep.subr.mxu0 0.0
    %873 = vmatpush1.msra.mxu0 %v790
    %874 = vmatprep.subr.mxu0 0.0
    %875 = vmatpush1.msra.mxu0 %v789
    %876 = vmatprep.subr.mxu0 0.0
    %877 = vmatpush1.msra.mxu0 %v788
    %878 = vmatprep.subr.mxu0 0.0
    %879 = vmatpush1.msra.mxu0 %v787
    %880 = vmatprep.subr.mxu0 0.0
    %881 = vmatpush1.msra.mxu0 %v786
    %882 = vmatprep.subr.mxu0 0.0
    %883 = vmatpush2.msra.mxu0 %v817
    %884 = vmatprep.subr.mxu0 0.0
    %885 = vmatpush2.msra.mxu0 %v816
    %886 = vmatprep.subr.mxu0 0.0
    %887 = vmatpush2.msra.mxu0 %v815
    %888 = vmatprep.subr.mxu0 0.0
    %889 = vmatpush2.msra.mxu0 %v814
    %890 = vmatprep.subr.mxu0 0.0
    %891 = vmatpush2.msra.mxu0 %v813
    %892 = vmatprep.subr.mxu0 0.0
    %893 = vmatpush2.msra.mxu0 %v812
    %894 = vmatprep.subr.mxu0 0.0
    %895 = vmatpush2.msra.mxu0 %v811
    %896 = vmatprep.subr.mxu0 0.0
    %897 = vmatpush2.msra.mxu0 %v810
    %898 = vmatprep.subr.mxu0 0.0
    %899 = vmatpush2.msra.mxu0 %v809
    %900 = vmatprep.subr.mxu0 0.0
    %901 = vmatpush2.msra.mxu0 %v808
    %902 = vmatprep.subr.mxu0 0.0
    %903 = vmatpush2.msra.mxu0 %v807
    %904 = vmatprep.subr.mxu0 0.0
    %905 = vmatpush2.msra.mxu0 %v806
    %906 = vmatprep.subr.mxu0 0.0
    %907 = vmatpush2.msra.mxu0 %v805
    %908 = vmatprep.subr.mxu0 0.0
    %909 = vmatpush2.msra.mxu0 %v804
    %910 = vmatprep.subr.mxu0 0.0
    %911 = vmatpush2.msra.mxu0 %v803
    %912 = vmatprep.subr.mxu0 0.0
    %913 = vmatpush2.msra.mxu0 %v802
    %914 = vmatprep.mubr.f32.mxu0 %v779
    %915 = vmatmul.mubr.f32.gmra.mxu0 %v778
    %v916 = vpop.f32.mrf.mxu0
    %v917 = vadd.f32 0.0, %v916
    %v918 = vpop.f32.mrf.mxu0
    %919 = vmatprep.mubr.f32.mxu0 %v783
    %920 = vmatmul.mubr.f32.gmra.mxu0 %v782
    %v921 = vpop.f32.mrf.mxu0
    %v922 = vadd.f32 0.0, %v921
    %v923 = vpop.f32.mrf.mxu0
    %924 = vdwg.mxu0
    %925 = vmatprep.subr.mxu0 0.0
    %926 = vmatpush1.msra.mxu0 %v833
    %927 = vmatprep.subr.mxu0 0.0
    %928 = vmatpush1.msra.mxu0 %v832
    %929 = vmatprep.subr.mxu0 0.0
    %930 = vmatpush1.msra.mxu0 %v831
    %931 = vmatprep.subr.mxu0 0.0
    %932 = vmatpush1.msra.mxu0 %v830
    %933 = vmatprep.subr.mxu0 0.0
    %934 = vmatpush1.msra.mxu0 %v829
    %935 = vmatprep.subr.mxu0 0.0
    %936 = vmatpush1.msra.mxu0 %v828
    %937 = vmatprep.subr.mxu0 0.0
    %938 = vmatpush1.msra.mxu0 %v827
    %939 = vmatprep.subr.mxu0 0.0
    %940 = vmatpush1.msra.mxu0 %v826
    %941 = vmatprep.subr.mxu0 0.0
    %942 = vmatpush1.msra.mxu0 %v825
    %943 = vmatprep.subr.mxu0 0.0
    %944 = vmatpush1.msra.mxu0 %v824
    %945 = vmatprep.subr.mxu0 0.0
    %946 = vmatpush1.msra.mxu0 %v823
    %947 = vmatprep.subr.mxu0 0.0
    %948 = vmatpush1.msra.mxu0 %v822
    %949 = vmatprep.subr.mxu0 0.0
    %950 = vmatpush1.msra.mxu0 %v821
    %951 = vmatprep.subr.mxu0 0.0
    %952 = vmatpush1.msra.mxu0 %v820
    %953 = vmatprep.subr.mxu0 0.0
    %954 = vmatpush1.msra.mxu0 %v819
    %955 = vmatprep.subr.mxu0 0.0
    %956 = vmatpush1.msra.mxu0 %v818
    %957 = vmatprep.subr.mxu0 0.0
    %958 = vmatpush2.msra.mxu0 %v849
    %959 = vmatprep.subr.mxu0 0.0
    %960 = vmatpush2.msra.mxu0 %v848
    %961 = vmatprep.subr.mxu0 0.0
    %962 = vmatpush2.msra.mxu0 %v847
    %963 = vmatprep.subr.mxu0 0.0
    %964 = vmatpush2.msra.mxu0 %v846
    %965 = vmatprep.subr.mxu0 0.0
    %966 = vmatpush2.msra.mxu0 %v845
    %967 = vmatprep.subr.mxu0 0.0
    %968 = vmatpush2.msra.mxu0 %v844
    %969 = vmatprep.subr.mxu0 0.0
    %970 = vmatpush2.msra.mxu0 %v843
    %971 = vmatprep.subr.mxu0 0.0
    %972 = vmatpush2.msra.mxu0 %v842
    %973 = vmatprep.subr.mxu0 0.0
    %974 = vmatpush2.msra.mxu0 %v841
    %975 = vmatprep.subr.mxu0 0.0
    %976 = vmatpush2.msra.mxu0 %v840
    %977 = vmatprep.subr.mxu0 0.0
    %978 = vmatpush2.msra.mxu0 %v839
    %979 = vmatprep.subr.mxu0 0.0
    %980 = vmatpush2.msra.mxu0 %v838
    %981 = vmatprep.subr.mxu0 0.0
    %982 = vmatpush2.msra.mxu0 %v837
    %983 = vmatprep.subr.mxu0 0.0
    %984 = vmatpush2.msra.mxu0 %v836
    %985 = vmatprep.subr.mxu0 0.0
    %986 = vmatpush2.msra.mxu0 %v835
    %987 = vmatprep.subr.mxu0 0.0
    %988 = vmatpush2.msra.mxu0 %v834
    %989 = vmatprep.mubr.f32.mxu0 %v781
    %990 = vmatmul.mubr.f32.gmra.mxu0 %v780
    %v991 = vpop.f32.mrf.mxu0
    %v992 = vadd.f32 %v917, %v991
    %v993 = vpop.f32.mrf.mxu0
    %994 = vmatprep.mubr.f32.mxu0 %v785
    %995 = vmatmul.mubr.f32.gmra.mxu0 %v784
    %v996 = vpop.f32.mrf.mxu0
    %v997 = vadd.f32 %v922, %v996
    %v998 = vpop.f32.mrf.mxu0
    %999 = vdwg.mxu0
    %v1000 = vld [vmem:[%s7] sm:$0xff]
    %v1001 = vld [vmem:[%s7 + $0x8] sm:$0xff]
    %v1002 = vld [vmem:[%s7 + $0x10] sm:$0xff]
    %v1003 = vld [vmem:[%s7 + $0x18] sm:$0xff]
    %v1004 = vld [vmem:[%s8] sm:$0xff]
    %v1005 = vld [vmem:[%s8 + $0x8] sm:$0xff]
    %v1006 = vld [vmem:[%s8 + $0x10] sm:$0xff]
    %v1007 = vld [vmem:[%s8 + $0x18] sm:$0xff]
    %1009 = vset.pattern.permute.xlu0 0
    %1010 = vperm.xlu0 %1009, %v1004
    %v1011 = vpop.permute.xlu0 %1010
    %1014 = vset.pattern.permute.xlu0 0
    %1015 = vperm.xlu0 %1014, %v1005
    %v1016 = vpop.permute.xlu0 %1015
    %1019 = vset.pattern.permute.xlu0 0
    %1020 = vperm.xlu0 %1019, %v1006
    %v1021 = vpop.permute.xlu0 %1020
    %1024 = vset.pattern.permute.xlu0 0
    %1025 = vperm.xlu0 %1024, %v1007
    %v1026 = vpop.permute.xlu0 %1025
    %vm1028 = vcmask 130048
    %v1030 = vsel %vm1028, %v1000, 0
    %v1033 = vsel %vm1028, %v1001, 0
    %v1036 = vsel %vm1028, %v1002, 0
    %v1039 = vsel %vm1028, %v1003, 0
    %1041 = vmatprep.subr.mxu0 0.0
    %1042 = vmatpush1.msra.mxu0 0.0
    %1043 = vmatprep.subr.mxu0 0.0
    %1044 = vmatpush1.msra.mxu0 0.0
    %1045 = vmatprep.subr.mxu0 0.0
    %1046 = vmatpush1.msra.mxu0 0.0
    %1047 = vmatprep.subr.mxu0 0.0
    %1048 = vmatpush1.msra.mxu0 0.0
    %1049 = vmatprep.subr.mxu0 0.0
    %1050 = vmatpush1.msra.mxu0 0.0
    %1051 = vmatprep.subr.mxu0 0.0
    %1052 = vmatpush1.msra.mxu0 0.0
    %1053 = vmatprep.subr.mxu0 0.0
    %1054 = vmatpush1.msra.mxu0 0.0
    %1055 = vmatprep.subr.mxu0 0.0
    %1056 = vmatpush1.msra.mxu0 0.0
    %1057 = vmatprep.subr.mxu0 0.0
    %1058 = vmatpush1.msra.mxu0 0.0
    %1059 = vmatprep.subr.mxu0 0.0
    %1060 = vmatpush1.msra.mxu0 0.0
    %1061 = vmatprep.subr.mxu0 0.0
    %1062 = vmatpush1.msra.mxu0 0.0
    %1063 = vmatprep.subr.mxu0 0.0
    %1064 = vmatpush1.msra.mxu0 0.0
    %1065 = vmatprep.subr.mxu0 0.0
    %1066 = vmatpush1.msra.mxu0 0.0
    %1067 = vmatprep.subr.mxu0 0.0
    %1068 = vmatpush1.msra.mxu0 0.0
    %1069 = vmatprep.subr.mxu0 0.0
    %1070 = vmatpush1.msra.mxu0 %v997
    %1071 = vmatprep.subr.mxu0 0.0
    %1072 = vmatpush1.msra.mxu0 %v992
    %1073 = vmatprep.subr.mxu0 0.0
    %1074 = vmatpush2.msra.mxu0 0.0
    %1075 = vmatprep.subr.mxu0 0.0
    %1076 = vmatpush2.msra.mxu0 0.0
    %1077 = vmatprep.subr.mxu0 0.0
    %1078 = vmatpush2.msra.mxu0 0.0
    %1079 = vmatprep.subr.mxu0 0.0
    %1080 = vmatpush2.msra.mxu0 0.0
    %1081 = vmatprep.subr.mxu0 0.0
    %1082 = vmatpush2.msra.mxu0 0.0
    %1083 = vmatprep.subr.mxu0 0.0
    %1084 = vmatpush2.msra.mxu0 0.0
    %1085 = vmatprep.subr.mxu0 0.0
    %1086 = vmatpush2.msra.mxu0 0.0
    %1087 = vmatprep.subr.mxu0 0.0
    %1088 = vmatpush2.msra.mxu0 0.0
    %1089 = vmatprep.subr.mxu0 0.0
    %1090 = vmatpush2.msra.mxu0 0.0
    %1091 = vmatprep.subr.mxu0 0.0
    %1092 = vmatpush2.msra.mxu0 0.0
    %1093 = vmatprep.subr.mxu0 0.0
    %1094 = vmatpush2.msra.mxu0 0.0
    %1095 = vmatprep.subr.mxu0 0.0
    %1096 = vmatpush2.msra.mxu0 0.0
    %1097 = vmatprep.subr.mxu0 0.0
    %1098 = vmatpush2.msra.mxu0 0.0
    %1099 = vmatprep.subr.mxu0 0.0
    %1100 = vmatpush2.msra.mxu0 0.0
    %1101 = vmatprep.subr.mxu0 0.0
    %1102 = vmatpush2.msra.mxu0 0.0
    %1103 = vmatprep.subr.mxu0 0.0
    %1104 = vmatpush2.msra.mxu0 0.0
    %1105 = vmatprep.mubr.f32.mxu0 0.0
    %1106 = vmatmul.mubr.f32.gmra.mxu0 %v1030
    %v1107 = vpop.f32.mrf.mxu0
    %v1108 = vadd.f32 %v1011, %v1107
    %v1109 = vpop.f32.mrf.mxu0
    %1110 = vmatprep.mubr.f32.mxu0 0.0
    %1111 = vmatmul.mubr.f32.gmra.mxu0 %v1033
    %v1112 = vpop.f32.mrf.mxu0
    %v1113 = vadd.f32 %v1016, %v1112
    %v1114 = vpop.f32.mrf.mxu0
    %1115 = vmatprep.mubr.f32.mxu0 0.0
    %1116 = vmatmul.mubr.f32.gmra.mxu0 %v1036
    %v1117 = vpop.f32.mrf.mxu0
    %v1118 = vadd.f32 %v1021, %v1117
    %v1119 = vpop.f32.mrf.mxu0
    %1120 = vmatprep.mubr.f32.mxu0 0.0
    %1121 = vmatmul.mubr.f32.gmra.mxu0 %v1039
    %v1122 = vpop.f32.mrf.mxu0
    %v1123 = vadd.f32 %v1026, %v1122
    %v1124 = vpop.f32.mrf.mxu0
    %1125 = vdwg.mxu0
    %v1126 = vmax.f32 %v1108, 0.0
    %v1127 = vmax.f32 %v1113, 0.0
    %v1128 = vmax.f32 %v1118, 0.0
    %v1129 = vmax.f32 %v1123, 0.0
    %v1130 = vld [vmem:[%s9] sm:$0x1]
    %v1131 = vld [vmem:[#allocation2] sm:$0x1]
    %1133 = vset.pattern.permute.xlu0 0
    %1134 = vperm.xlu0 %1133, %v1131
    %v1135 = vpop.permute.xlu0 %1134
    %v1137 = vlaneseq
    %v1138 = vshrl.u32 %v1137, 7
    %v1139 = vsub.s32 0, %v1138
    %v1140 = vrot.slane %v1135, %v1139
    %vm1141 = vcmask 261120
    %v1143 = vsel %vm1141, %v1130, 0
    %1145 = vmatprep.subr.mxu0 0.0
    %1146 = vmatpush1.msra.mxu0 0.0
    %1147 = vmatprep.subr.mxu0 0.0
    %1148 = vmatpush1.msra.mxu0 0.0
    %1149 = vmatprep.subr.mxu0 0.0
    %1150 = vmatpush1.msra.mxu0 0.0
    %1151 = vmatprep.subr.mxu0 0.0
    %1152 = vmatpush1.msra.mxu0 0.0
    %1153 = vmatprep.subr.mxu0 0.0
    %1154 = vmatpush1.msra.mxu0 0.0
    %1155 = vmatprep.subr.mxu0 0.0
    %1156 = vmatpush1.msra.mxu0 0.0
    %1157 = vmatprep.subr.mxu0 0.0
    %1158 = vmatpush1.msra.mxu0 0.0
    %1159 = vmatprep.subr.mxu0 0.0
    %1160 = vmatpush1.msra.mxu0 0.0
    %1161 = vmatprep.subr.mxu0 0.0
    %1162 = vmatpush1.msra.mxu0 0.0
    %1163 = vmatprep.subr.mxu0 0.0
    %1164 = vmatpush1.msra.mxu0 0.0
    %1165 = vmatprep.subr.mxu0 0.0
    %1166 = vmatpush1.msra.mxu0 0.0
    %1167 = vmatprep.subr.mxu0 0.0
    %1168 = vmatpush1.msra.mxu0 0.0
    %1169 = vmatprep.subr.mxu0 0.0
    %1170 = vmatpush1.msra.mxu0 %v1129
    %1171 = vmatprep.subr.mxu0 0.0
    %1172 = vmatpush1.msra.mxu0 %v1128
    %1173 = vmatprep.subr.mxu0 0.0
    %1174 = vmatpush1.msra.mxu0 %v1127
    %1175 = vmatprep.subr.mxu0 0.0
    %1176 = vmatpush1.msra.mxu0 %v1126
    %1177 = vmatprep.subr.mxu0 0.0
    %1178 = vmatpush2.msra.mxu0 0.0
    %1179 = vmatprep.subr.mxu0 0.0
    %1180 = vmatpush2.msra.mxu0 0.0
    %1181 = vmatprep.subr.mxu0 0.0
    %1182 = vmatpush2.msra.mxu0 0.0
    %1183 = vmatprep.subr.mxu0 0.0
    %1184 = vmatpush2.msra.mxu0 0.0
    %1185 = vmatprep.subr.mxu0 0.0
    %1186 = vmatpush2.msra.mxu0 0.0
    %1187 = vmatprep.subr.mxu0 0.0
    %1188 = vmatpush2.msra.mxu0 0.0
    %1189 = vmatprep.subr.mxu0 0.0
    %1190 = vmatpush2.msra.mxu0 0.0
    %1191 = vmatprep.subr.mxu0 0.0
    %1192 = vmatpush2.msra.mxu0 0.0
    %1193 = vmatprep.subr.mxu0 0.0
    %1194 = vmatpush2.msra.mxu0 0.0
    %1195 = vmatprep.subr.mxu0 0.0
    %1196 = vmatpush2.msra.mxu0 0.0
    %1197 = vmatprep.subr.mxu0 0.0
    %1198 = vmatpush2.msra.mxu0 0.0
    %1199 = vmatprep.subr.mxu0 0.0
    %1200 = vmatpush2.msra.mxu0 0.0
    %1201 = vmatprep.subr.mxu0 0.0
    %1202 = vmatpush2.msra.mxu0 0.0
    %1203 = vmatprep.subr.mxu0 0.0
    %1204 = vmatpush2.msra.mxu0 0.0
    %1205 = vmatprep.subr.mxu0 0.0
    %1206 = vmatpush2.msra.mxu0 0.0
    %1207 = vmatprep.subr.mxu0 0.0
    %1208 = vmatpush2.msra.mxu0 0.0
    %1209 = vmatprep.mubr.f32.mxu0 0.0
    %1210 = vmatmul.mubr.f32.gmra.mxu0 %v1143
    %v1211 = vpop.f32.mrf.mxu0
    %v1212 = vadd.f32 %v1140, %v1211
    %v1213 = vpop.f32.mrf.mxu0
    %1214 = vdwg.mxu0
    %vm1215 = vcmask 8192
    %1216 = vst.msk [vmem:[#allocation3] sm:$0x1] %vm1215, %v1212
    // Predicated region
    $region46: #{tpu_custom_call.1} parent=1 // pred_check
      _
    $region47: #{tpu_custom_call.1} parent=1 // pred_check_branch
      %1218 = sbr.rel (0) target = $region49
    $region48: #{tpu_custom_call.1} parent=1 // pred_region
      %s1220 = ssub.s32 16, 16
      %1221 = vsyncadd [#allocation4], %s1220
      %s1223 = sshll.u32 [#allocation3], 4
      %s1224 = int_to_ptr.vmem [resolvable:$true] %s1223
      %1226 = dma.vmem_to_hbm [thread:$0]  %s1224, 16, %s11, [#allocation4]
    $region49: #{tpu_custom_call.1} parent=1 // pred_fallthru
      _
    // Predicated region
    $region50: #{tpu_custom_call.1} parent=1 // pred_check
      _
    $region51: #{tpu_custom_call.1} parent=1 // pred_check_branch
      %1228 = sbr.rel (0) target = $region53
    $region52: #{tpu_custom_call.1} parent=1 // pred_region
      %1229 = dma.done [#allocation4], 16
    $region53: #{tpu_custom_call.1} parent=1 // pred_fallthru
      _
    %1230 = vsyncpa [#allocation4], 1

</llo_original>
